<compile_context>
chip_gen: v7x
topology: tpu7x:2x2x1
jax: 0.10.0
libtpu: 0.0.40
codegen_flags: <defaults>
</compile_context>

<pallas_src>
import jax
import jax.numpy as jnp
from jax import lax
from jax.experimental import pallas as pl
from jax.experimental.pallas import tpu as pltpu

# Small shapes consistent with the module (scaled down from 512 / 50):
MODEL_DIM = 32       # model_dim
SEQ_LEN = 8          # seq_len
KSIZE = 5            # conv / resblock kernel size (padding = 2, "same")
PAD = KSIZE // 2
N_BLOCKS = 5
BATCH = 4
NUM_SHARDS = 2       # "parallel" grid axis (uses both TCs on v7x)
SHARD_N = BATCH // NUM_SHARDS
ACT0 = 8             # active rows [ACT0, ACT0+SEQ_LEN) in pbuf (sublane aligned)
LPAD = 24            # >= ACT0 + SEQ_LEN + PAD, multiple of 8


# ----------------------------- kernel ---------------------------------------

def discriminator_kernel(xc_ref, w0_ref, b0_ref, wr1_ref, br1_ref,
                         wr2_ref, br2_ref, wl_ref, bl_ref,
                         o_ref, h_ref, pbuf):
    # xc_ref:  (SHARD_N*L, K*4) f32  im2col'd padded input (per shard)
    # w0_ref:  (K*4, C)         f32  first conv weight (im2col form)
    # b0_ref:  (1, C)           f32
    # wr1/wr2: (1, K, C, C)     f32  this resblock's conv weights (wr2 pre-scaled 0.3)
    # br1/br2: (1, 1, C)        f32  (br2 pre-scaled by 0.3)
    # wl_ref:  (L, C)           f32  linear weight (not batch-tiled)
    # bl_ref:  (1, 1)           f32
    # o_ref:   (1, SHARD_N, 1)  f32  per-shard output block
    # h_ref:   (SHARD_N*L, C)   f32  scratch: residual stream, carried over blocks
    # pbuf:    (SHARD_N, LPAD, C) f32 scratch: halo-padded branch activations
    i = pl.program_id(1)                 # resblock index ("arbitrary" axis)
    L, C = SEQ_LEN, MODEL_DIM
    M = SHARD_N * L

    @pl.when(i == 0)
    def _init():
        # Zero the halo scratch once per shard (rows outside [ACT0, ACT0+L)
        # are never written again), then run the 4->C input conv as a single
        # matmul over the wrapper-im2col'd input.
        pbuf[...] = jnp.zeros_like(pbuf)
        h_ref[...] = (jnp.dot(xc_ref[...], w0_ref[...],
                              preferred_element_type=jnp.float32)
                      + b0_ref[...])

    def conv_from_pbuf(w_ref, b_ref):
        # 5-tap "same" conv as 5 accumulating per-tap matmuls (no im2col slab).
        # Tap t reads rows [ACT0-PAD+t, ACT0-PAD+t+L) of the halo scratch.
        acc = (jnp.dot(pbuf[:, ACT0 - PAD:ACT0 - PAD + L, :].reshape(M, C),
                       w_ref[0, 0], preferred_element_type=jnp.float32)
               + b_ref[0])
        for t in range(1, KSIZE):
            lo = ACT0 - PAD + t
            acc = acc + jnp.dot(pbuf[:, lo:lo + L, :].reshape(M, C),
                                w_ref[0, t], preferred_element_type=jnp.float32)
        return acc

    # resblock i:  h = h + conv2(relu(conv1(relu(h))))   (0.3 folded into conv2)
    h = h_ref[...]
    pbuf[:, ACT0:ACT0 + L, :] = jnp.maximum(h, 0.0).reshape(SHARD_N, L, C)
    r = conv_from_pbuf(wr1_ref, br1_ref)
    pbuf[:, ACT0:ACT0 + L, :] = jnp.maximum(r, 0.0).reshape(SHARD_N, L, C)
    r = conv_from_pbuf(wr2_ref, br2_ref)
    h = h + r
    h_ref[...] = h

    @pl.when(i == N_BLOCKS - 1)
    def _final():
        # flatten + linear: broadcast the (L, C) weight over the shard batch,
        # lane-reduce then sublane-reduce, one (SHARD_N, 1) write.
        p = h.reshape(SHARD_N, L, C) * wl_ref[...][None, :, :]
        s = jnp.sum(p, axis=2)                     # (SHARD_N, L)
        s = jnp.sum(s, axis=1, keepdims=True)      # (SHARD_N, 1)
        o_ref[0] = s + bl_ref[...]


# ----------------------------- wrapper / glue --------------------------------

def discriminator_forward(x_ncl, params):
    """x_ncl: (N, 4, seq_len) float32 (PyTorch layout). Returns (N, 1)."""
    N, L, C, K = BATCH, SEQ_LEN, MODEL_DIM, KSIZE
    assert x_ncl.shape == (N, 4, L)

    # Input: NCL -> NLC, zero-pad seq axis, im2col the tiny 4-channel input
    # once in the wrapper (keeps the ragged (., 4) tile out of the kernel).
    x = jnp.transpose(x_ncl, (0, 2, 1))                          # (N, L, 4)
    xp = jnp.pad(x, ((0, 0), (PAD, PAD), (0, 0)))                # (N, L+4, 4)
    xc = jnp.concatenate([xp[:, t:t + L, :] for t in range(K)], axis=-1)
    xc = xc.reshape(N * L, K * 4).astype(jnp.float32)

    # Weights: PyTorch (Cout, Cin, K) -> per-tap (K, Cin, Cout); no K*C flatten.
    w0 = jnp.transpose(params['conv_w'], (2, 1, 0)).reshape(K * 4, C)
    b0 = params['conv_b'][None, :]                               # (1, C)
    wr1 = jnp.transpose(params['res_w1'], (0, 3, 2, 1))          # (NB, K, C, C)
    br1 = params['res_b1'][:, None, :]                           # (NB, 1, C)
    wr2 = 0.3 * jnp.transpose(params['res_w2'], (0, 3, 2, 1))    # fold 0.3 scale
    br2 = 0.3 * params['res_b2'][:, None, :]
    # Linear: lin_w[0, c*L + l] -> wl[l, c]; passed ONCE (not tiled over batch).
    wl = jnp.transpose(params['lin_w'][0].reshape(C, L))         # (L, C)
    bl = params['lin_b'].reshape(1, 1)

    out = pl.pallas_call(
        discriminator_kernel,
        out_shape=jax.ShapeDtypeStruct((NUM_SHARDS, SHARD_N, 1), jnp.float32),
        grid_spec=pltpu.PrefetchScalarGridSpec(
            num_scalar_prefetch=0,
            grid=(NUM_SHARDS, N_BLOCKS),
            in_specs=[
                pl.BlockSpec((SHARD_N * L, K * 4), lambda s, i: (s, 0)),   # xc
                pl.BlockSpec((K * 4, C), lambda s, i: (0, 0)),             # w0
                pl.BlockSpec((1, C), lambda s, i: (0, 0)),                 # b0
                pl.BlockSpec((1, K, C, C), lambda s, i: (i, 0, 0, 0)),     # wr1 (streamed per block)
                pl.BlockSpec((1, 1, C), lambda s, i: (i, 0, 0)),           # br1
                pl.BlockSpec((1, K, C, C), lambda s, i: (i, 0, 0, 0)),     # wr2 (streamed per block)
                pl.BlockSpec((1, 1, C), lambda s, i: (i, 0, 0)),           # br2
                pl.BlockSpec((L, C), lambda s, i: (0, 0)),                 # wl
                pl.BlockSpec((1, 1), lambda s, i: (0, 0)),                 # bl
            ],
            out_specs=pl.BlockSpec((1, SHARD_N, 1), lambda s, i: (s, 0, 0)),
            scratch_shapes=[
                pltpu.VMEM((SHARD_N * L, C), jnp.float32),     # residual stream h
                pltpu.VMEM((SHARD_N, LPAD, C), jnp.float32),   # halo-padded branch
            ],
        ),
        compiler_params=pltpu.CompilerParams(
            dimension_semantics=("parallel", "arbitrary"),
            vmem_limit_bytes=32 * 1024 * 1024,
        ),
    )(xc, w0, b0, wr1, br1, wr2, br2, wl, bl)
    return out.reshape(N, 1)


# ----------------------------- pure-JAX reference ----------------------------

def reference_forward(x_ncl, params):
    def conv1d(x, w, b):
        y = lax.conv_general_dilated(
            x, w, window_strides=(1,), padding=((PAD, PAD),),
            dimension_numbers=('NCH', 'OIH', 'NCH'))
        return y + b[None, :, None]

    h = conv1d(x_ncl, params['conv_w'], params['conv_b'])
    for i in range(N_BLOCKS):
        r = jax.nn.relu(h)
        r = conv1d(r, params['res_w1'][i], params['res_b1'][i])
        r = jax.nn.relu(r)
        r = conv1d(r, params['res_w2'][i], params['res_b2'][i])
        h = h + 0.3 * r
    flat = h.reshape(h.shape[0], -1)                 # (N, C*L), PyTorch order
    return flat @ params['lin_w'].T + params['lin_b']


# ----------------------------- params ----------------------------------------

def init_params(key):
    C, L, K = MODEL_DIM, SEQ_LEN, KSIZE
    ks = jax.random.split(key, 8)
    s = 0.1
    return {
        'conv_w': s * jax.random.normal(ks[0], (C, 4, K), jnp.float32),
        'conv_b': s * jax.random.normal(ks[1], (C,), jnp.float32),
        'res_w1': s * jax.random.normal(ks[2], (N_BLOCKS, C, C, K), jnp.float32),
        'res_b1': s * jax.random.normal(ks[3], (N_BLOCKS, C), jnp.float32),
        'res_w2': s * jax.random.normal(ks[4], (N_BLOCKS, C, C, K), jnp.float32),
        'res_b2': s * jax.random.normal(ks[5], (N_BLOCKS, C), jnp.float32),
        'lin_w': s * jax.random.normal(ks[6], (1, L * C), jnp.float32),
        'lin_b': s * jax.random.normal(ks[7], (1,), jnp.float32),
    }


if __name__ == "__main__":
    key = jax.random.PRNGKey(0)
    kx, kp = jax.random.split(key)
    # PyTorch-layout input (N, channels=4, seq_len) — one-hot-like DNA logits.
    x = jax.random.normal(kx, (BATCH, 4, SEQ_LEN), jnp.float32)
    params = init_params(kp)

    out = discriminator_forward(x, params)
    out = jax.block_until_ready(out)

    ref = reference_forward(x, params)
    assert out.shape == (BATCH, 1), out.shape
    # Kernel matmuls are f32; tolerance covers the reference conv's default
    # (reduced-precision) TPU lowering.
    assert jnp.allclose(out, ref, atol=2e-2, rtol=2e-2), (out, ref)
    print("KERNEL_OK")
</pallas_src>

<mosaic_0001>
module attributes {stable_mosaic.version = 11 : i64} {
  func.func @discriminator_kernel(%arg0: i32, %arg1: i32, %arg2: memref<16x20xf32, #tpu.memory_space<vmem>>, %arg3: memref<20x32xf32, #tpu.memory_space<vmem>>, %arg4: memref<1x32xf32, #tpu.memory_space<vmem>>, %arg5: memref<1x5x32x32xf32, #tpu.memory_space<vmem>>, %arg6: memref<1x1x32xf32, #tpu.memory_space<vmem>>, %arg7: memref<1x5x32x32xf32, #tpu.memory_space<vmem>>, %arg8: memref<1x1x32xf32, #tpu.memory_space<vmem>>, %arg9: memref<8x32xf32, #tpu.memory_space<vmem>>, %arg10: memref<1x1xf32, #tpu.memory_space<vmem>>, %arg11: memref<1x2x1xf32, #tpu.memory_space<vmem>>, %arg12: memref<16x32xf32, #tpu.memory_space<vmem>>, %arg13: memref<2x24x32xf32, #tpu.memory_space<vmem>>) attributes {dimension_semantics = [#tpu.dimension_semantics<parallel>, #tpu.dimension_semantics<arbitrary>], iteration_bounds = array<i64: 2, 5>, scalar_prefetch = 0 : i64, scratch_operands = 2 : i64, tpu.core_type = #tpu.core_type<tc>, window_params = [{transform_indices = @transform_0, window_bounds = array<i64: 16, 20>}, {pipeline_mode = #tpu.pipeline_mode<synchronous>, transform_indices = @transform_1, window_bounds = array<i64: 20, 32>}, {pipeline_mode = #tpu.pipeline_mode<synchronous>, transform_indices = @transform_2, window_bounds = array<i64: 1, 32>}, {transform_indices = @transform_3, window_bounds = array<i64: 1, 5, 32, 32>}, {transform_indices = @transform_4, window_bounds = array<i64: 1, 1, 32>}, {transform_indices = @transform_5, window_bounds = array<i64: 1, 5, 32, 32>}, {transform_indices = @transform_6, window_bounds = array<i64: 1, 1, 32>}, {pipeline_mode = #tpu.pipeline_mode<synchronous>, transform_indices = @transform_7, window_bounds = array<i64: 8, 32>}, {pipeline_mode = #tpu.pipeline_mode<synchronous>, transform_indices = @transform_8, window_bounds = array<i64: 1, 1>}, {transform_indices = @transform_9, window_bounds = array<i64: 1, 2, 1>}]} {
    %c0_i32 = arith.constant 0 : i32
    %0 = arith.cmpi eq, %arg1, %c0_i32 : i32
    %1 = arith.extui %0 : i1 to i32
    %c0_i32_0 = arith.constant 0 : i32
    %2 = arith.cmpi ne, %1, %c0_i32_0 : i32
    scf.if %2 {
      %cst_89 = arith.constant 0.000000e+00 : f32
      %83 = vector.broadcast %cst_89 : f32 to vector<2x24x32xf32>
      %c0_90 = arith.constant 0 : index
      %c0_91 = arith.constant 0 : index
      %c0_92 = arith.constant 0 : index
      %84 = vector.load %arg13[%c0_90, %c0_91, %c0_92] : memref<2x24x32xf32, #tpu.memory_space<vmem>>, vector<2x24x32xf32>
      tpu.vector_store %arg13[%c0_90, %c0_91, %c0_92], %83 {strides = array<i32>} : memref<2x24x32xf32, #tpu.memory_space<vmem>>, vector<2x24x32xf32>,
      %c0_93 = arith.constant 0 : index
      %c0_94 = arith.constant 0 : index
      %85 = vector.load %arg2[%c0_93, %c0_94] : memref<16x20xf32, #tpu.memory_space<vmem>>, vector<16x20xf32>
      %c0_95 = arith.constant 0 : index
      %c0_96 = arith.constant 0 : index
      %86 = vector.load %arg3[%c0_95, %c0_96] : memref<20x32xf32, #tpu.memory_space<vmem>>, vector<20x32xf32>
      %cst_97 = arith.constant dense<0.000000e+00> : vector<16x32xf32>
      %87 = tpu.matmul %85, %86, %cst_97 {dimension_numbers = #tpu.dot_dimension_numbers<[1], [0], [0], [1], [0, 0, 1, 1], [], []>} : vector<16x20xf32>, vector<20x32xf32>, vector<16x32xf32> -> vector<16x32xf32>
      %c0_98 = arith.constant 0 : index
      %c0_99 = arith.constant 0 : index
      %88 = vector.load %arg4[%c0_98, %c0_99] : memref<1x32xf32, #tpu.memory_space<vmem>>, vector<1x32xf32>
      %89 = vector.broadcast %88 : vector<1x32xf32> to vector<16x32xf32>
      %90 = arith.addf %87, %89 : vector<16x32xf32>
      %c0_100 = arith.constant 0 : index
      %c0_101 = arith.constant 0 : index
      %91 = vector.load %arg12[%c0_100, %c0_101] : memref<16x32xf32, #tpu.memory_space<vmem>>, vector<16x32xf32>
      tpu.vector_store %arg12[%c0_100, %c0_101], %90 {strides = array<i32>} : memref<16x32xf32, #tpu.memory_space<vmem>>, vector<16x32xf32>,
    } else {
    }
    %c0 = arith.constant 0 : index
    %c0_1 = arith.constant 0 : index
    %3 = vector.load %arg12[%c0, %c0_1] : memref<16x32xf32, #tpu.memory_space<vmem>>, vector<16x32xf32>
    %cst = arith.constant 0.000000e+00 : f32
    %4 = vector.broadcast %cst : f32 to vector<16x32xf32>
    %5 = arith.maximumf %3, %4 : vector<16x32xf32>
    %6 = vector.shape_cast %5 : vector<16x32xf32> to vector<2x8x32xf32>
    %c0_2 = arith.constant 0 : index
    %c8 = arith.constant 8 : index
    %c0_3 = arith.constant 0 : index
    %7 = vector.load %arg13[%c0_2, %c8, %c0_3] : memref<2x24x32xf32, #tpu.memory_space<vmem>>, vector<2x8x32xf32>
    tpu.vector_store %arg13[%c0_2, %c8, %c0_3], %6 {strides = array<i32>} : memref<2x24x32xf32, #tpu.memory_space<vmem>>, vector<2x8x32xf32>,
    %c0_4 = arith.constant 0 : index
    %c6 = arith.constant 6 : index
    %c0_5 = arith.constant 0 : index
    %8 = vector.load %arg13[%c0_4, %c6, %c0_5] : memref<2x24x32xf32, #tpu.memory_space<vmem>>, vector<2x8x32xf32>
    %9 = vector.shape_cast %8 : vector<2x8x32xf32> to vector<16x32xf32>
    %c0_6 = arith.constant 0 : index
    %c0_7 = arith.constant 0 : index
    %c0_8 = arith.constant 0 : index
    %c0_9 = arith.constant 0 : index
    %10 = vector.load %arg5[%c0_6, %c0_7, %c0_8, %c0_9] : memref<1x5x32x32xf32, #tpu.memory_space<vmem>>, vector<1x1x32x32xf32>
    %11 = vector.shape_cast %10 : vector<1x1x32x32xf32> to vector<32x32xf32>
    %cst_10 = arith.constant dense<0.000000e+00> : vector<16x32xf32>
    %12 = tpu.matmul %9, %11, %cst_10 {dimension_numbers = #tpu.dot_dimension_numbers<[1], [0], [0], [1], [0, 0, 1, 1], [], []>} : vector<16x32xf32>, vector<32x32xf32>, vector<16x32xf32> -> vector<16x32xf32>
    %c0_11 = arith.constant 0 : index
    %c0_12 = arith.constant 0 : index
    %c0_13 = arith.constant 0 : index
    %13 = vector.load %arg6[%c0_11, %c0_12, %c0_13] : memref<1x1x32xf32, #tpu.memory_space<vmem>>, vector<1x1x32xf32>
    %14 = vector.shape_cast %13 : vector<1x1x32xf32> to vector<1x32xf32>
    %15 = vector.broadcast %14 : vector<1x32xf32> to vector<16x32xf32>
    %16 = arith.addf %12, %15 : vector<16x32xf32>
    %c0_14 = arith.constant 0 : index
    %c7 = arith.constant 7 : index
    %c0_15 = arith.constant 0 : index
    %17 = vector.load %arg13[%c0_14, %c7, %c0_15] : memref<2x24x32xf32, #tpu.memory_space<vmem>>, vector<2x8x32xf32>
    %18 = vector.shape_cast %17 : vector<2x8x32xf32> to vector<16x32xf32>
    %c0_16 = arith.constant 0 : index
    %c1 = arith.constant 1 : index
    %c0_17 = arith.constant 0 : index
    %c0_18 = arith.constant 0 : index
    %19 = vector.load %arg5[%c0_16, %c1, %c0_17, %c0_18] : memref<1x5x32x32xf32, #tpu.memory_space<vmem>>, vector<1x1x32x32xf32>
    %20 = vector.shape_cast %19 : vector<1x1x32x32xf32> to vector<32x32xf32>
    %cst_19 = arith.constant dense<0.000000e+00> : vector<16x32xf32>
    %21 = tpu.matmul %18, %20, %cst_19 {dimension_numbers = #tpu.dot_dimension_numbers<[1], [0], [0], [1], [0, 0, 1, 1], [], []>} : vector<16x32xf32>, vector<32x32xf32>, vector<16x32xf32> -> vector<16x32xf32>
    %22 = arith.addf %16, %21 : vector<16x32xf32>
    %c0_20 = arith.constant 0 : index
    %c8_21 = arith.constant 8 : index
    %c0_22 = arith.constant 0 : index
    %23 = vector.load %arg13[%c0_20, %c8_21, %c0_22] : memref<2x24x32xf32, #tpu.memory_space<vmem>>, vector<2x8x32xf32>
    %24 = vector.shape_cast %23 : vector<2x8x32xf32> to vector<16x32xf32>
    %c0_23 = arith.constant 0 : index
    %c2 = arith.constant 2 : index
    %c0_24 = arith.constant 0 : index
    %c0_25 = arith.constant 0 : index
    %25 = vector.load %arg5[%c0_23, %c2, %c0_24, %c0_25] : memref<1x5x32x32xf32, #tpu.memory_space<vmem>>, vector<1x1x32x32xf32>
    %26 = vector.shape_cast %25 : vector<1x1x32x32xf32> to vector<32x32xf32>
    %cst_26 = arith.constant dense<0.000000e+00> : vector<16x32xf32>
    %27 = tpu.matmul %24, %26, %cst_26 {dimension_numbers = #tpu.dot_dimension_numbers<[1], [0], [0], [1], [0, 0, 1, 1], [], []>} : vector<16x32xf32>, vector<32x32xf32>, vector<16x32xf32> -> vector<16x32xf32>
    %28 = arith.addf %22, %27 : vector<16x32xf32>
    %c0_27 = arith.constant 0 : index
    %c9 = arith.constant 9 : index
    %c0_28 = arith.constant 0 : index
    %29 = vector.load %arg13[%c0_27, %c9, %c0_28] : memref<2x24x32xf32, #tpu.memory_space<vmem>>, vector<2x8x32xf32>
    %30 = vector.shape_cast %29 : vector<2x8x32xf32> to vector<16x32xf32>
    %c0_29 = arith.constant 0 : index
    %c3 = arith.constant 3 : index
    %c0_30 = arith.constant 0 : index
    %c0_31 = arith.constant 0 : index
    %31 = vector.load %arg5[%c0_29, %c3, %c0_30, %c0_31] : memref<1x5x32x32xf32, #tpu.memory_space<vmem>>, vector<1x1x32x32xf32>
    %32 = vector.shape_cast %31 : vector<1x1x32x32xf32> to vector<32x32xf32>
    %cst_32 = arith.constant dense<0.000000e+00> : vector<16x32xf32>
    %33 = tpu.matmul %30, %32, %cst_32 {dimension_numbers = #tpu.dot_dimension_numbers<[1], [0], [0], [1], [0, 0, 1, 1], [], []>} : vector<16x32xf32>, vector<32x32xf32>, vector<16x32xf32> -> vector<16x32xf32>
    %34 = arith.addf %28, %33 : vector<16x32xf32>
    %c0_33 = arith.constant 0 : index
    %c10 = arith.constant 10 : index
    %c0_34 = arith.constant 0 : index
    %35 = vector.load %arg13[%c0_33, %c10, %c0_34] : memref<2x24x32xf32, #tpu.memory_space<vmem>>, vector<2x8x32xf32>
    %36 = vector.shape_cast %35 : vector<2x8x32xf32> to vector<16x32xf32>
    %c0_35 = arith.constant 0 : index
    %c4 = arith.constant 4 : index
    %c0_36 = arith.constant 0 : index
    %c0_37 = arith.constant 0 : index
    %37 = vector.load %arg5[%c0_35, %c4, %c0_36, %c0_37] : memref<1x5x32x32xf32, #tpu.memory_space<vmem>>, vector<1x1x32x32xf32>
    %38 = vector.shape_cast %37 : vector<1x1x32x32xf32> to vector<32x32xf32>
    %cst_38 = arith.constant dense<0.000000e+00> : vector<16x32xf32>
    %39 = tpu.matmul %36, %38, %cst_38 {dimension_numbers = #tpu.dot_dimension_numbers<[1], [0], [0], [1], [0, 0, 1, 1], [], []>} : vector<16x32xf32>, vector<32x32xf32>, vector<16x32xf32> -> vector<16x32xf32>
    %40 = arith.addf %34, %39 : vector<16x32xf32>
    %cst_39 = arith.constant 0.000000e+00 : f32
    %41 = vector.broadcast %cst_39 : f32 to vector<16x32xf32>
    %42 = arith.maximumf %40, %41 : vector<16x32xf32>
    %43 = vector.shape_cast %42 : vector<16x32xf32> to vector<2x8x32xf32>
    %c0_40 = arith.constant 0 : index
    %c8_41 = arith.constant 8 : index
    %c0_42 = arith.constant 0 : index
    %44 = vector.load %arg13[%c0_40, %c8_41, %c0_42] : memref<2x24x32xf32, #tpu.memory_space<vmem>>, vector<2x8x32xf32>
    tpu.vector_store %arg13[%c0_40, %c8_41, %c0_42], %43 {strides = array<i32>} : memref<2x24x32xf32, #tpu.memory_space<vmem>>, vector<2x8x32xf32>,
    %c0_43 = arith.constant 0 : index
    %c6_44 = arith.constant 6 : index
    %c0_45 = arith.constant 0 : index
    %45 = vector.load %arg13[%c0_43, %c6_44, %c0_45] : memref<2x24x32xf32, #tpu.memory_space<vmem>>, vector<2x8x32xf32>
    %46 = vector.shape_cast %45 : vector<2x8x32xf32> to vector<16x32xf32>
    %c0_46 = arith.constant 0 : index
    %c0_47 = arith.constant 0 : index
    %c0_48 = arith.constant 0 : index
    %c0_49 = arith.constant 0 : index
    %47 = vector.load %arg7[%c0_46, %c0_47, %c0_48, %c0_49] : memref<1x5x32x32xf32, #tpu.memory_space<vmem>>, vector<1x1x32x32xf32>
    %48 = vector.shape_cast %47 : vector<1x1x32x32xf32> to vector<32x32xf32>
    %cst_50 = arith.constant dense<0.000000e+00> : vector<16x32xf32>
    %49 = tpu.matmul %46, %48, %cst_50 {dimension_numbers = #tpu.dot_dimension_numbers<[1], [0], [0], [1], [0, 0, 1, 1], [], []>} : vector<16x32xf32>, vector<32x32xf32>, vector<16x32xf32> -> vector<16x32xf32>
    %c0_51 = arith.constant 0 : index
    %c0_52 = arith.constant 0 : index
    %c0_53 = arith.constant 0 : index
    %50 = vector.load %arg8[%c0_51, %c0_52, %c0_53] : memref<1x1x32xf32, #tpu.memory_space<vmem>>, vector<1x1x32xf32>
    %51 = vector.shape_cast %50 : vector<1x1x32xf32> to vector<1x32xf32>
    %52 = vector.broadcast %51 : vector<1x32xf32> to vector<16x32xf32>
    %53 = arith.addf %49, %52 : vector<16x32xf32>
    %c0_54 = arith.constant 0 : index
    %c7_55 = arith.constant 7 : index
    %c0_56 = arith.constant 0 : index
    %54 = vector.load %arg13[%c0_54, %c7_55, %c0_56] : memref<2x24x32xf32, #tpu.memory_space<vmem>>, vector<2x8x32xf32>
    %55 = vector.shape_cast %54 : vector<2x8x32xf32> to vector<16x32xf32>
    %c0_57 = arith.constant 0 : index
    %c1_58 = arith.constant 1 : index
    %c0_59 = arith.constant 0 : index
    %c0_60 = arith.constant 0 : index
    %56 = vector.load %arg7[%c0_57, %c1_58, %c0_59, %c0_60] : memref<1x5x32x32xf32, #tpu.memory_space<vmem>>, vector<1x1x32x32xf32>
    %57 = vector.shape_cast %56 : vector<1x1x32x32xf32> to vector<32x32xf32>
    %cst_61 = arith.constant dense<0.000000e+00> : vector<16x32xf32>
    %58 = tpu.matmul %55, %57, %cst_61 {dimension_numbers = #tpu.dot_dimension_numbers<[1], [0], [0], [1], [0, 0, 1, 1], [], []>} : vector<16x32xf32>, vector<32x32xf32>, vector<16x32xf32> -> vector<16x32xf32>
    %59 = arith.addf %53, %58 : vector<16x32xf32>
    %c0_62 = arith.constant 0 : index
    %c8_63 = arith.constant 8 : index
    %c0_64 = arith.constant 0 : index
    %60 = vector.load %arg13[%c0_62, %c8_63, %c0_64] : memref<2x24x32xf32, #tpu.memory_space<vmem>>, vector<2x8x32xf32>
    %61 = vector.shape_cast %60 : vector<2x8x32xf32> to vector<16x32xf32>
    %c0_65 = arith.constant 0 : index
    %c2_66 = arith.constant 2 : index
    %c0_67 = arith.constant 0 : index
    %c0_68 = arith.constant 0 : index
    %62 = vector.load %arg7[%c0_65, %c2_66, %c0_67, %c0_68] : memref<1x5x32x32xf32, #tpu.memory_space<vmem>>, vector<1x1x32x32xf32>
    %63 = vector.shape_cast %62 : vector<1x1x32x32xf32> to vector<32x32xf32>
    %cst_69 = arith.constant dense<0.000000e+00> : vector<16x32xf32>
    %64 = tpu.matmul %61, %63, %cst_69 {dimension_numbers = #tpu.dot_dimension_numbers<[1], [0], [0], [1], [0, 0, 1, 1], [], []>} : vector<16x32xf32>, vector<32x32xf32>, vector<16x32xf32> -> vector<16x32xf32>
    %65 = arith.addf %59, %64 : vector<16x32xf32>
    %c0_70 = arith.constant 0 : index
    %c9_71 = arith.constant 9 : index
    %c0_72 = arith.constant 0 : index
    %66 = vector.load %arg13[%c0_70, %c9_71, %c0_72] : memref<2x24x32xf32, #tpu.memory_space<vmem>>, vector<2x8x32xf32>
    %67 = vector.shape_cast %66 : vector<2x8x32xf32> to vector<16x32xf32>
    %c0_73 = arith.constant 0 : index
    %c3_74 = arith.constant 3 : index
    %c0_75 = arith.constant 0 : index
    %c0_76 = arith.constant 0 : index
    %68 = vector.load %arg7[%c0_73, %c3_74, %c0_75, %c0_76] : memref<1x5x32x32xf32, #tpu.memory_space<vmem>>, vector<1x1x32x32xf32>
    %69 = vector.shape_cast %68 : vector<1x1x32x32xf32> to vector<32x32xf32>
    %cst_77 = arith.constant dense<0.000000e+00> : vector<16x32xf32>
    %70 = tpu.matmul %67, %69, %cst_77 {dimension_numbers = #tpu.dot_dimension_numbers<[1], [0], [0], [1], [0, 0, 1, 1], [], []>} : vector<16x32xf32>, vector<32x32xf32>, vector<16x32xf32> -> vector<16x32xf32>
    %71 = arith.addf %65, %70 : vector<16x32xf32>
    %c0_78 = arith.constant 0 : index
    %c10_79 = arith.constant 10 : index
    %c0_80 = arith.constant 0 : index
    %72 = vector.load %arg13[%c0_78, %c10_79, %c0_80] : memref<2x24x32xf32, #tpu.memory_space<vmem>>, vector<2x8x32xf32>
    %73 = vector.shape_cast %72 : vector<2x8x32xf32> to vector<16x32xf32>
    %c0_81 = arith.constant 0 : index
    %c4_82 = arith.constant 4 : index
    %c0_83 = arith.constant 0 : index
    %c0_84 = arith.constant 0 : index
    %74 = vector.load %arg7[%c0_81, %c4_82, %c0_83, %c0_84] : memref<1x5x32x32xf32, #tpu.memory_space<vmem>>, vector<1x1x32x32xf32>
    %75 = vector.shape_cast %74 : vector<1x1x32x32xf32> to vector<32x32xf32>
    %cst_85 = arith.constant dense<0.000000e+00> : vector<16x32xf32>
    %76 = tpu.matmul %73, %75, %cst_85 {dimension_numbers = #tpu.dot_dimension_numbers<[1], [0], [0], [1], [0, 0, 1, 1], [], []>} : vector<16x32xf32>, vector<32x32xf32>, vector<16x32xf32> -> vector<16x32xf32>
    %77 = arith.addf %71, %76 : vector<16x32xf32>
    %78 = arith.addf %3, %77 : vector<16x32xf32>
    %c0_86 = arith.constant 0 : index
    %c0_87 = arith.constant 0 : index
    %79 = vector.load %arg12[%c0_86, %c0_87] : memref<16x32xf32, #tpu.memory_space<vmem>>, vector<16x32xf32>
    tpu.vector_store %arg12[%c0_86, %c0_87], %78 {strides = array<i32>} : memref<16x32xf32, #tpu.memory_space<vmem>>, vector<16x32xf32>,
    %c4_i32 = arith.constant 4 : i32
    %80 = arith.cmpi eq, %arg1, %c4_i32 : i32
    %81 = arith.extui %80 : i1 to i32
    %c0_i32_88 = arith.constant 0 : i32
    %82 = arith.cmpi ne, %81, %c0_i32_88 : i32
    scf.if %82 {
      %83 = vector.shape_cast %78 : vector<16x32xf32> to vector<2x8x32xf32>
      %c0_89 = arith.constant 0 : index
      %c0_90 = arith.constant 0 : index
      %84 = vector.load %arg9[%c0_89, %c0_90] : memref<8x32xf32, #tpu.memory_space<vmem>>, vector<8x32xf32>
      %85 = vector.shape_cast %84 : vector<8x32xf32> to vector<1x8x32xf32>
      %86 = vector.broadcast %85 : vector<1x8x32xf32> to vector<2x8x32xf32>
      %87 = arith.mulf %83, %86 : vector<2x8x32xf32>
      %cst_91 = arith.constant dense<0.000000e+00> : vector<2x8xf32>
      %88 = vector.multi_reduction <add>, %87, %cst_91 [2] : vector<2x8x32xf32> to vector<2x8xf32>
      %cst_92 = arith.constant dense<0.000000e+00> : vector<2xf32>
      %89 = vector.multi_reduction <add>, %88, %cst_92 [1] : vector<2x8xf32> to vector<2xf32>
      %90 = vector.shape_cast %89 : vector<2xf32> to vector<2x1xf32>
      %c0_93 = arith.constant 0 : index
      %c0_94 = arith.constant 0 : index
      %91 = vector.load %arg10[%c0_93, %c0_94] : memref<1x1xf32, #tpu.memory_space<vmem>>, vector<1x1xf32>
      %92 = vector.broadcast %91 : vector<1x1xf32> to vector<2x1xf32>
      %93 = arith.addf %90, %92 : vector<2x1xf32>
      %c0_95 = arith.constant 0 : index
      %c0_96 = arith.constant 0 : index
      %c0_97 = arith.constant 0 : index
      %94 = vector.load %arg11[%c0_95, %c0_96, %c0_97] : memref<1x2x1xf32, #tpu.memory_space<vmem>>, vector<1x2x1xf32>
      %95 = vector.shape_cast %94 : vector<1x2x1xf32> to vector<2x1xf32>
      %96 = vector.shape_cast %93 : vector<2x1xf32> to vector<1x2x1xf32>
      tpu.vector_store %arg11[%c0_95, %c0_96, %c0_97], %96 {strides = array<i32>} : memref<1x2x1xf32, #tpu.memory_space<vmem>>, vector<1x2x1xf32>,
    } else {
    }
    return
  }
  func.func @transform_0(%arg0: i32, %arg1: i32) -> (i32, i32) {
    %c0_i32 = arith.constant 0 : i32
    %c0_i32_0 = arith.constant 0 : i32
    return %arg0, %c0_i32 : i32, i32
  }
  func.func @transform_1(%arg0: i32, %arg1: i32) -> (i32, i32) {
    %c0_i32 = arith.constant 0 : i32
    %c0_i32_0 = arith.constant 0 : i32
    %c0_i32_1 = arith.constant 0 : i32
    return %c0_i32, %c0_i32_0 : i32, i32
  }
  func.func @transform_2(%arg0: i32, %arg1: i32) -> (i32, i32) {
    %c0_i32 = arith.constant 0 : i32
    %c0_i32_0 = arith.constant 0 : i32
    %c0_i32_1 = arith.constant 0 : i32
    return %c0_i32, %c0_i32_0 : i32, i32
  }
  func.func @transform_3(%arg0: i32, %arg1: i32) -> (i32, i32, i32, i32) {
    %c0_i32 = arith.constant 0 : i32
    %c0_i32_0 = arith.constant 0 : i32
    %c0_i32_1 = arith.constant 0 : i32
    %c0_i32_2 = arith.constant 0 : i32
    return %arg1, %c0_i32, %c0_i32_0, %c0_i32_1 : i32, i32, i32, i32
  }
  func.func @transform_4(%arg0: i32, %arg1: i32) -> (i32, i32, i32) {
    %c0_i32 = arith.constant 0 : i32
    %c0_i32_0 = arith.constant 0 : i32
    %c0_i32_1 = arith.constant 0 : i32
    return %arg1, %c0_i32, %c0_i32_0 : i32, i32, i32
  }
  func.func @transform_5(%arg0: i32, %arg1: i32) -> (i32, i32, i32, i32) {
    %c0_i32 = arith.constant 0 : i32
    %c0_i32_0 = arith.constant 0 : i32
    %c0_i32_1 = arith.constant 0 : i32
    %c0_i32_2 = arith.constant 0 : i32
    return %arg1, %c0_i32, %c0_i32_0, %c0_i32_1 : i32, i32, i32, i32
  }
  func.func @transform_6(%arg0: i32, %arg1: i32) -> (i32, i32, i32) {
    %c0_i32 = arith.constant 0 : i32
    %c0_i32_0 = arith.constant 0 : i32
    %c0_i32_1 = arith.constant 0 : i32
    return %arg1, %c0_i32, %c0_i32_0 : i32, i32, i32
  }
  func.func @transform_7(%arg0: i32, %arg1: i32) -> (i32, i32) {
    %c0_i32 = arith.constant 0 : i32
    %c0_i32_0 = arith.constant 0 : i32
    %c0_i32_1 = arith.constant 0 : i32
    return %c0_i32, %c0_i32_0 : i32, i32
  }
  func.func @transform_8(%arg0: i32, %arg1: i32) -> (i32, i32) {
    %c0_i32 = arith.constant 0 : i32
    %c0_i32_0 = arith.constant 0 : i32
    %c0_i32_1 = arith.constant 0 : i32
    return %c0_i32, %c0_i32_0 : i32, i32
  }
  func.func @transform_9(%arg0: i32, %arg1: i32) -> (i32, i32, i32) {
    %c0_i32 = arith.constant 0 : i32
    %c0_i32_0 = arith.constant 0 : i32
    %c0_i32_1 = arith.constant 0 : i32
    return %arg0, %c0_i32, %c0_i32_0 : i32, i32, i32
  }
}

</mosaic_0001>

<llo_original>
// kernel: tpu_custom_call.1
$region0: #{tpu_custom_call.1}
  #allocation0 [shape = 'u32[]', space=smem, size = 0x4, offset = 0x4, fixed_abs, tag = 'smem constant byte address 0x4 - core index']
  #allocation1 [shape = 'u32[144,128]{1,0:T(1,128)}', space=vmem, size = 0x12000, scoped, tag = 'internal scratch']
  #allocation2 [shape = 'f32[16,32]{1,0:T(8,128)}', space=vmem, size = 0x2000, scoped, tag = 'scratch operand']
  #allocation3 [shape = 'f32[2,24,32]{2,1,0:T(8,128)}', space=vmem, size = 0x6000, scoped, tag = 'scratch operand']
  #allocation4 [shape = 'f32[1,1]{1,0:T(1,128)S(1)}', space=vmem, size = 0x200, scoped, tag = 'scoped memory for tpu_custom_call.1']
  %s0 = inlined_call_operand.vmem [shape: f32[32,20], index: 0, kind: input, shape index: {}]
  %s1 = inlined_call_operand.vmem [shape: f32[20,32], index: 1, kind: input, shape index: {}]
  %s2 = inlined_call_operand.vmem [shape: f32[1,32], index: 2, kind: input, shape index: {}]
  %s3 = inlined_call_operand.hbm [shape: f32[5,5,32,32], index: 3, kind: input, shape index: {}]
  %s4 = inlined_call_operand.vmem [shape: f32[5,1,32], index: 4, kind: input, shape index: {}]
  %s5 = inlined_call_operand.hbm [shape: f32[5,5,32,32], index: 5, kind: input, shape index: {}]
  %s6 = inlined_call_operand.vmem [shape: f32[5,1,32], index: 6, kind: input, shape index: {}]
  %s7 = inlined_call_operand.vmem [shape: f32[8,32], index: 7, kind: input, shape index: {}]
  %s8 = inlined_call_operand.<no memory space> [shape: f32[1,1], index: 8, kind: input, shape index: {}]
  %s9 = inlined_call_operand.vmem [shape: f32[2,2,1], index: 9, kind: output, shape index: {}]
  %s10 = sld [smem:[#allocation0]]
  $region85: #{tpu_custom_call.1} parent=0
    _
  %s12 = ssub.s32 1, %s10
  %s13 = scalar_select 0, %s12, %s10
  %v14 = vstv %s8
  %15 = vst [vmem:[#allocation4] sm:$0x1] %v14
  $region1: #{tpu_custom_call.1} parent=0
    #allocation5 [shape = 'u8[163840]{0}', space=vmem, size = 0x28000, scoped, tag = 'input window, operand 3']
    #allocation6 [shape = 's32[2]{0}', space=sflag, size = 0x8, scoped, tag = 'scoped memory for tpu_custom_call.1']
    #allocation7 [shape = 'u8[163840]{0}', space=vmem, size = 0x28000, scoped, tag = 'input window, operand 5']
    #allocation8 [shape = 's32[2]{0}', space=sflag, size = 0x8, scoped, tag = 'scoped memory for tpu_custom_call.1']
    %16 = vsyncpa [#allocation6], 0
    %s17 = scalar_lea.sflag [#allocation6], 1
    %18 = vsyncpa %s17, 0
    %19 = vsyncpa [#allocation8], 0
    %s20 = scalar_lea.sflag [#allocation8], 1
    %21 = vsyncpa %s20, 0
    loop: start=0, step=1, limit=12
    $region2: #{tpu_custom_call.1} parent=1 // loop_pre_header
      _
    $region3: #{tpu_custom_call.1} parent=1 // loop_header
      %s23 = sphi 0, %s27
      %p24 = scmp.ge.s32.totalorder %s23, 12
      %s30 = sphi 0, %s42
      %s31 = sphi 0, %s38
      %s32 = sphi 0, %s30
      %s33 = sphi 0, %s31
      %s34 = sphi 0, %s32
      %s35 = sphi 0, %s33
      %s45 = sphi 0, %s47
      %s48 = sphi 0, %s45
      %s49 = sphi 0, %s48
      %s65 = sphi 0, %s49
      %s69 = sphi 0, %s69
      %s71 = sphi 0, %s69
      %s72 = sphi 0, %s71
      %s86 = sphi 0, %s72
      %s90 = sphi 0, %s90
      %s92 = sphi 0, %s90
      %s93 = sphi 0, %s92
      %s107 = sphi 0, %s93
      %s113 = sphi 0, %s115
      %s116 = sphi 0, %s113
      %s117 = sphi 0, %s116
      %s133 = sphi 0, %s117
      %s139 = sphi 0, %s141
      %s142 = sphi 0, %s139
      %s143 = sphi 0, %s142
      %s159 = sphi 0, %s143
      %s165 = sphi 0, %s167
      %s168 = sphi 0, %s165
      %s169 = sphi 0, %s168
      %s185 = sphi 0, %s169
      %s191 = sphi 0, %s193
      %s194 = sphi 0, %s191
      %s195 = sphi 0, %s194
      %s211 = sphi 0, %s195
      %s215 = sphi 0, %s215
      %s217 = sphi 0, %s215
      %s218 = sphi 0, %s217
      %s232 = sphi 0, %s218
      %s236 = sphi 0, %s236
      %s238 = sphi 0, %s236
      %s239 = sphi 0, %s238
      %s253 = sphi 0, %s239
      %s259 = sphi 0, %s261
      %s262 = sphi 0, %s259
      %s263 = sphi 0, %s262
      %s279 = sphi 0, %s263
    $region4: #{tpu_custom_call.1} parent=1 // loop_header_branch
      %26 = sbr.rel (%p24) target = $region8
    $region5: #{tpu_custom_call.1} parent=1 // loop_body
      %s28 = ssub.s32 %s23, 1
      %s29 = ssub.s32 %s23, 2
      %s36 = sadd.s32 1, %s31
      %p37 = scmp.ge.s32.totalorder %s36, 5
      %s38 = scalar_select %p37, 0, %s36
      %s39 = sadd.s32 1, %s30
      %s40 = scalar_select %p37, %s39, %s30
      %p41 = scmp.ge.s32.totalorder %s40, 2
      %s42 = scalar_select %p41, 0, %s40
      %s43 = ssub.s32 %s30, %s42
      %p44 = scmp.eq.s32.totalorder %s43, 0
      %s46 = sadd.s32 %s45, 1
      %s47 = scalar_select %p44, %s45, %s46
      %p50 = pneg %p44
      %p51 = scmp.eq.s32.totalorder %s23, 9
      %p52 = por %p50, %p51
      %p53 = scmp.ne.s32.totalorder %s45, %s48
      %p54 = scmp.eq.s32.totalorder %s23, 0
      %p55 = por %p53, %p54
      %p56 = scmp.ne.s32.totalorder %s45, %s48
      %p57 = scmp.eq.s32.totalorder %s28, 9
      %p58 = por %p56, %p57
      %p59 = scmp.ne.s32.totalorder %s48, %s49
      %p60 = scmp.eq.s32.totalorder %s28, 0
      %p61 = por %p59, %p60
      %p62 = scmp.ne.s32.totalorder %s48, %s49
      %p63 = scmp.eq.s32.totalorder %s29, 9
      %p64 = por %p62, %p63
      %p66 = scmp.ne.s32.totalorder %s49, %s65
      %p67 = scmp.eq.s32.totalorder %s29, 0
      %p68 = por %p66, %p67
      %s70 = sadd.s32 %s69, 1
      %p73 = scmp.eq.s32.totalorder %s23, 9
      %p74 = scmp.ne.s32.totalorder %s69, %s71
      %p75 = scmp.eq.s32.totalorder %s23, 0
      %p76 = por %p74, %p75
      %p77 = scmp.ne.s32.totalorder %s69, %s71
      %p78 = scmp.eq.s32.totalorder %s28, 9
      %p79 = por %p77, %p78
      %p80 = scmp.ne.s32.totalorder %s71, %s72
      %p81 = scmp.eq.s32.totalorder %s28, 0
      %p82 = por %p80, %p81
      %p83 = scmp.ne.s32.totalorder %s71, %s72
      %p84 = scmp.eq.s32.totalorder %s29, 9
      %p85 = por %p83, %p84
      %p87 = scmp.ne.s32.totalorder %s72, %s86
      %p88 = scmp.eq.s32.totalorder %s29, 0
      %p89 = por %p87, %p88
      %s91 = sadd.s32 %s90, 1
      %p94 = scmp.eq.s32.totalorder %s23, 9
      %p95 = scmp.ne.s32.totalorder %s90, %s92
      %p96 = scmp.eq.s32.totalorder %s23, 0
      %p97 = por %p95, %p96
      %p98 = scmp.ne.s32.totalorder %s90, %s92
      %p99 = scmp.eq.s32.totalorder %s28, 9
      %p100 = por %p98, %p99
      %p101 = scmp.ne.s32.totalorder %s92, %s93
      %p102 = scmp.eq.s32.totalorder %s28, 0
      %p103 = por %p101, %p102
      %p104 = scmp.ne.s32.totalorder %s92, %s93
      %p105 = scmp.eq.s32.totalorder %s29, 9
      %p106 = por %p104, %p105
      %p108 = scmp.ne.s32.totalorder %s93, %s107
      %p109 = scmp.eq.s32.totalorder %s29, 0
      %p110 = por %p108, %p109
      %s111 = ssub.s32 %s31, %s38
      %p112 = scmp.eq.s32.totalorder %s111, 0
      %s114 = sadd.s32 %s113, 1
      %s115 = scalar_select %p112, %s113, %s114
      %p118 = pneg %p112
      %p119 = scmp.eq.s32.totalorder %s23, 9
      %p120 = por %p118, %p119
      %p121 = scmp.ne.s32.totalorder %s113, %s116
      %p122 = scmp.eq.s32.totalorder %s23, 0
      %p123 = por %p121, %p122
      %p124 = scmp.ne.s32.totalorder %s113, %s116
      %p125 = scmp.eq.s32.totalorder %s28, 9
      %p126 = por %p124, %p125
      %p127 = scmp.ne.s32.totalorder %s116, %s117
      %p128 = scmp.eq.s32.totalorder %s28, 0
      %p129 = por %p127, %p128
      %p130 = scmp.ne.s32.totalorder %s116, %s117
      %p131 = scmp.eq.s32.totalorder %s29, 9
      %p132 = por %p130, %p131
      %p134 = scmp.ne.s32.totalorder %s117, %s133
      %p135 = scmp.eq.s32.totalorder %s29, 0
      %p136 = por %p134, %p135
      %s137 = ssub.s32 %s31, %s38
      %p138 = scmp.eq.s32.totalorder %s137, 0
      %s140 = sadd.s32 %s139, 1
      %s141 = scalar_select %p138, %s139, %s140
      %p144 = pneg %p138
      %p145 = scmp.eq.s32.totalorder %s23, 9
      %p146 = por %p144, %p145
      %p147 = scmp.ne.s32.totalorder %s139, %s142
      %p148 = scmp.eq.s32.totalorder %s23, 0
      %p149 = por %p147, %p148
      %p150 = scmp.ne.s32.totalorder %s139, %s142
      %p151 = scmp.eq.s32.totalorder %s28, 9
      %p152 = por %p150, %p151
      %p153 = scmp.ne.s32.totalorder %s142, %s143
      %p154 = scmp.eq.s32.totalorder %s28, 0
      %p155 = por %p153, %p154
      %p156 = scmp.ne.s32.totalorder %s142, %s143
      %p157 = scmp.eq.s32.totalorder %s29, 9
      %p158 = por %p156, %p157
      %p160 = scmp.ne.s32.totalorder %s143, %s159
      %p161 = scmp.eq.s32.totalorder %s29, 0
      %p162 = por %p160, %p161
      %s163 = ssub.s32 %s31, %s38
      %p164 = scmp.eq.s32.totalorder %s163, 0
      %s166 = sadd.s32 %s165, 1
      %s167 = scalar_select %p164, %s165, %s166
      %p170 = pneg %p164
      %p171 = scmp.eq.s32.totalorder %s23, 9
      %p172 = por %p170, %p171
      %p173 = scmp.ne.s32.totalorder %s165, %s168
      %p174 = scmp.eq.s32.totalorder %s23, 0
      %p175 = por %p173, %p174
      %p176 = scmp.ne.s32.totalorder %s165, %s168
      %p177 = scmp.eq.s32.totalorder %s28, 9
      %p178 = por %p176, %p177
      %p179 = scmp.ne.s32.totalorder %s168, %s169
      %p180 = scmp.eq.s32.totalorder %s28, 0
      %p181 = por %p179, %p180
      %p182 = scmp.ne.s32.totalorder %s168, %s169
      %p183 = scmp.eq.s32.totalorder %s29, 9
      %p184 = por %p182, %p183
      %p186 = scmp.ne.s32.totalorder %s169, %s185
      %p187 = scmp.eq.s32.totalorder %s29, 0
      %p188 = por %p186, %p187
      %s189 = ssub.s32 %s31, %s38
      %p190 = scmp.eq.s32.totalorder %s189, 0
      %s192 = sadd.s32 %s191, 1
      %s193 = scalar_select %p190, %s191, %s192
      %p196 = pneg %p190
      %p197 = scmp.eq.s32.totalorder %s23, 9
      %p198 = por %p196, %p197
      %p199 = scmp.ne.s32.totalorder %s191, %s194
      %p200 = scmp.eq.s32.totalorder %s23, 0
      %p201 = por %p199, %p200
      %p202 = scmp.ne.s32.totalorder %s191, %s194
      %p203 = scmp.eq.s32.totalorder %s28, 9
      %p204 = por %p202, %p203
      %p205 = scmp.ne.s32.totalorder %s194, %s195
      %p206 = scmp.eq.s32.totalorder %s28, 0
      %p207 = por %p205, %p206
      %p208 = scmp.ne.s32.totalorder %s194, %s195
      %p209 = scmp.eq.s32.totalorder %s29, 9
      %p210 = por %p208, %p209
      %p212 = scmp.ne.s32.totalorder %s195, %s211
      %p213 = scmp.eq.s32.totalorder %s29, 0
      %p214 = por %p212, %p213
      %s216 = sadd.s32 %s215, 1
      %p219 = scmp.eq.s32.totalorder %s23, 9
      %p220 = scmp.ne.s32.totalorder %s215, %s217
      %p221 = scmp.eq.s32.totalorder %s23, 0
      %p222 = por %p220, %p221
      %p223 = scmp.ne.s32.totalorder %s215, %s217
      %p224 = scmp.eq.s32.totalorder %s28, 9
      %p225 = por %p223, %p224
      %p226 = scmp.ne.s32.totalorder %s217, %s218
      %p227 = scmp.eq.s32.totalorder %s28, 0
      %p228 = por %p226, %p227
      %p229 = scmp.ne.s32.totalorder %s217, %s218
      %p230 = scmp.eq.s32.totalorder %s29, 9
      %p231 = por %p229, %p230
      %p233 = scmp.ne.s32.totalorder %s218, %s232
      %p234 = scmp.eq.s32.totalorder %s29, 0
      %p235 = por %p233, %p234
      %s237 = sadd.s32 %s236, 1
      %p240 = scmp.eq.s32.totalorder %s23, 9
      %p241 = scmp.ne.s32.totalorder %s236, %s238
      %p242 = scmp.eq.s32.totalorder %s23, 0
      %p243 = por %p241, %p242
      %p244 = scmp.ne.s32.totalorder %s236, %s238
      %p245 = scmp.eq.s32.totalorder %s28, 9
      %p246 = por %p244, %p245
      %p247 = scmp.ne.s32.totalorder %s238, %s239
      %p248 = scmp.eq.s32.totalorder %s28, 0
      %p249 = por %p247, %p248
      %p250 = scmp.ne.s32.totalorder %s238, %s239
      %p251 = scmp.eq.s32.totalorder %s29, 9
      %p252 = por %p250, %p251
      %p254 = scmp.ne.s32.totalorder %s239, %s253
      %p255 = scmp.eq.s32.totalorder %s29, 0
      %p256 = por %p254, %p255
      %s257 = ssub.s32 %s30, %s42
      %p258 = scmp.eq.s32.totalorder %s257, 0
      %s260 = sadd.s32 %s259, 1
      %s261 = scalar_select %p258, %s259, %s260
      %p264 = pneg %p258
      %p265 = scmp.eq.s32.totalorder %s23, 9
      %p266 = por %p264, %p265
      %p267 = scmp.ne.s32.totalorder %s259, %s262
      %p268 = scmp.eq.s32.totalorder %s23, 0
      %p269 = por %p267, %p268
      %p270 = scmp.ne.s32.totalorder %s259, %s262
      %p271 = scmp.eq.s32.totalorder %s28, 9
      %p272 = por %p270, %p271
      %p273 = scmp.ne.s32.totalorder %s262, %s263
      %p274 = scmp.eq.s32.totalorder %s28, 0
      %p275 = por %p273, %p274
      %p276 = scmp.ne.s32.totalorder %s262, %s263
      %p277 = scmp.eq.s32.totalorder %s29, 9
      %p278 = por %p276, %p277
      %p280 = scmp.ne.s32.totalorder %s263, %s279
      %p281 = scmp.eq.s32.totalorder %s29, 0
      %p282 = por %p280, %p281
      %p283 = scmp.le.s32.totalorder 1, %s23
      %p284 = scmp.lt.s32.totalorder %s23, 11
      %p285 = pnand %p283, %p284
      %p286 = pneg %p285
      // Predicated region
      $region9: #{tpu_custom_call.1} parent=5 // pred_check
        _
      $region10: #{tpu_custom_call.1} parent=5 // pred_check_branch
        %288 = sbr.rel (%p285) target = $region12
      $region11: #{tpu_custom_call.1} parent=5 // pred_region
        %s289 = ssub.s32 %s23, 1
        // Predicated region
        $region13: #{tpu_custom_call.1} parent=11 // pred_check
          %p290 = pneg %p82
        $region14: #{tpu_custom_call.1} parent=11 // pred_check_branch
          %292 = sbr.rel (%p290) target = $region16
        $region15: #{tpu_custom_call.1} parent=11 // pred_region
          _
        $region16: #{tpu_custom_call.1} parent=11 // pred_fallthru
          _
        // Predicated region
        $region17: #{tpu_custom_call.1} parent=11 // pred_check
          %p293 = pneg %p103
        $region18: #{tpu_custom_call.1} parent=11 // pred_check_branch
          %295 = sbr.rel (%p293) target = $region20
        $region19: #{tpu_custom_call.1} parent=11 // pred_region
          _
        $region20: #{tpu_custom_call.1} parent=11 // pred_fallthru
          _
        // Predicated region
        $region21: #{tpu_custom_call.1} parent=11 // pred_check
          %p296 = pneg %p228
        $region22: #{tpu_custom_call.1} parent=11 // pred_check_branch
          %298 = sbr.rel (%p296) target = $region24
        $region23: #{tpu_custom_call.1} parent=11 // pred_region
          _
        $region24: #{tpu_custom_call.1} parent=11 // pred_fallthru
          _
        // Predicated region
        $region25: #{tpu_custom_call.1} parent=11 // pred_check
          %p299 = pneg %p249
        $region26: #{tpu_custom_call.1} parent=11 // pred_check_branch
          %301 = sbr.rel (%p299) target = $region28
        $region27: #{tpu_custom_call.1} parent=11 // pred_region
          _
        $region28: #{tpu_custom_call.1} parent=11 // pred_fallthru
          _
      $region12: #{tpu_custom_call.1} parent=5 // pred_fallthru
        _
      %p302 = scmp.lt.s32.totalorder %s23, 10
      // Predicated region
      $region29: #{tpu_custom_call.1} parent=5 // pred_check
        %p303 = pneg %p302
      $region30: #{tpu_custom_call.1} parent=5 // pred_check_branch
        %305 = sbr.rel (%p303) target = $region32
      $region31: #{tpu_custom_call.1} parent=5 // pred_region
        // Predicated region
        $region33: #{tpu_custom_call.1} parent=31 // pred_check
          %p306 = pneg %p55
        $region34: #{tpu_custom_call.1} parent=31 // pred_check_branch
          %308 = sbr.rel (%p306) target = $region36
        $region35: #{tpu_custom_call.1} parent=31 // pred_region
          %s309 = smul.u32 2, %s30
          %p310 = scmp.lt.s32.totalorder %s309, 3
          %s311 = scalar_select %p310, %s309, 3
          %s312 = smul.addr %s311, 8
          %s313 = scalar_lea.vmem %s0, %s312
          %s314 = smul.u32 2, %s30
        $region36: #{tpu_custom_call.1} parent=31 // pred_fallthru
          _
        // Predicated region
        $region37: #{tpu_custom_call.1} parent=31 // pred_check
          %p315 = pneg %p123
        $region38: #{tpu_custom_call.1} parent=31 // pred_check_branch
          %317 = sbr.rel (%p315) target = $region40
        $region39: #{tpu_custom_call.1} parent=31 // pred_region
          %s318 = sand.u32 %s113, 1
          %s319 = scalar_lea.sflag [#allocation6], %s318
          %s320 = sand.u32 %s113, 1
          %s321 = smul.addr %s320, 160
          %s322 = scalar_lea.vmem [#allocation5], %s321
          %s324 = ssub.s32 2560, 2560
          %325 = vsyncadd %s319, %s324
          %s326 = smul.addr %s31, 20
          %s327 = smul.addr %s326, 128
          %s328 = scalar_lea.hbm %s3, %s327
          %s329 = sshll.u32 %s322, 4
          %s330 = int_to_ptr.vmem [resolvable:$true] %s329
          %335 = dma.hbm_to_vmem [thread:$0]  %s328, 2560, %s330, %s319, 128, 128, 8
        $region40: #{tpu_custom_call.1} parent=31 // pred_fallthru
          _
        // Predicated region
        $region41: #{tpu_custom_call.1} parent=31 // pred_check
          %p336 = pneg %p149
        $region42: #{tpu_custom_call.1} parent=31 // pred_check_branch
          %338 = sbr.rel (%p336) target = $region44
        $region43: #{tpu_custom_call.1} parent=31 // pred_region
          %p339 = scmp.lt.s32.totalorder %s31, 4
          %s340 = scalar_select %p339, %s31, 4
          %s341 = scalar_lea.vmem %s4, %s340
        $region44: #{tpu_custom_call.1} parent=31 // pred_fallthru
          _
        // Predicated region
        $region45: #{tpu_custom_call.1} parent=31 // pred_check
          %p342 = pneg %p175
        $region46: #{tpu_custom_call.1} parent=31 // pred_check_branch
          %344 = sbr.rel (%p342) target = $region48
        $region47: #{tpu_custom_call.1} parent=31 // pred_region
          %s345 = sand.u32 %s165, 1
          %s346 = scalar_lea.sflag [#allocation8], %s345
          %s347 = sand.u32 %s165, 1
          %s348 = smul.addr %s347, 160
          %s349 = scalar_lea.vmem [#allocation7], %s348
          %s351 = ssub.s32 2560, 2560
          %352 = vsyncadd %s346, %s351
          %s353 = smul.addr %s31, 20
          %s354 = smul.addr %s353, 128
          %s355 = scalar_lea.hbm %s5, %s354
          %s356 = sshll.u32 %s349, 4
          %s357 = int_to_ptr.vmem [resolvable:$true] %s356
          %362 = dma.hbm_to_vmem [thread:$0]  %s355, 2560, %s357, %s346, 128, 128, 8
        $region48: #{tpu_custom_call.1} parent=31 // pred_fallthru
          _
        // Predicated region
        $region49: #{tpu_custom_call.1} parent=31 // pred_check
          %p363 = pneg %p201
        $region50: #{tpu_custom_call.1} parent=31 // pred_check_branch
          %365 = sbr.rel (%p363) target = $region52
        $region51: #{tpu_custom_call.1} parent=31 // pred_region
          %p366 = scmp.lt.s32.totalorder %s31, 4
          %s367 = scalar_select %p366, %s31, 4
          %s368 = scalar_lea.vmem %s6, %s367
        $region52: #{tpu_custom_call.1} parent=31 // pred_fallthru
          _
      $region32: #{tpu_custom_call.1} parent=5 // pred_fallthru
        _
      %p369 = scmp.le.s32.totalorder 1, %s23
      %p370 = scmp.lt.s32.totalorder %s23, 11
      %p371 = pnand %p369, %p370
      %p372 = pneg %p371
      // Predicated region
      $region53: #{tpu_custom_call.1} parent=5 // pred_check
        _
      $region54: #{tpu_custom_call.1} parent=5 // pred_check_branch
        %374 = sbr.rel (%p371) target = $region56
      $region55: #{tpu_custom_call.1} parent=5 // pred_region
        %s375 = ssub.s32 %s23, 1
        %s376 = sand.u32 %s116, 1
        %s377 = scalar_lea.sflag [#allocation6], %s376
        %s378 = sand.u32 %s116, 1
        %s379 = smul.addr %s378, 160
        %s380 = scalar_lea.vmem [#allocation5], %s379
        // Predicated region
        $region57: #{tpu_custom_call.1} parent=55 // pred_check
          %p381 = pneg %p129
        $region58: #{tpu_custom_call.1} parent=55 // pred_check_branch
          %383 = sbr.rel (%p381) target = $region60
        $region59: #{tpu_custom_call.1} parent=55 // pred_region
          %384 = dma.done %s377, 2560
        $region60: #{tpu_custom_call.1} parent=55 // pred_fallthru
          _
        %s385 = sand.u32 %s168, 1
        %s386 = scalar_lea.sflag [#allocation8], %s385
        %s387 = sand.u32 %s168, 1
        %s388 = smul.addr %s387, 160
        %s389 = scalar_lea.vmem [#allocation7], %s388
        // Predicated region
        $region61: #{tpu_custom_call.1} parent=55 // pred_check
          %p390 = pneg %p181
        $region62: #{tpu_custom_call.1} parent=55 // pred_check_branch
          %392 = sbr.rel (%p390) target = $region64
        $region63: #{tpu_custom_call.1} parent=55 // pred_region
          %393 = dma.done %s386, 2560
        $region64: #{tpu_custom_call.1} parent=55 // pred_fallthru
          _
        %s394 = smul.u32 2, %s32
        %p395 = scmp.lt.s32.totalorder %s394, 3
        %s396 = scalar_select %p395, %s394, 3
        %s397 = smul.addr %s396, 8
        %s398 = scalar_lea.vmem %s0, %s397
        %p399 = pneg %p61
        %p400 = pneg %p58
        %p401 = pneg %p82
        %p402 = pneg %p79
        %p403 = pneg %p103
        %p404 = pneg %p100
        %s405 = sand.u32 %s116, 1
        %s406 = scalar_lea.sflag [#allocation6], %s405
        %s407 = sand.u32 %s116, 1
        %s408 = smul.addr %s407, 160
        %s409 = scalar_lea.vmem [#allocation5], %s408
        %p410 = pneg %p129
        %p411 = pneg %p126
        %p412 = scmp.lt.s32.totalorder %s33, 4
        %s413 = scalar_select %p412, %s33, 4
        %s414 = scalar_lea.vmem %s4, %s413
        %p415 = pneg %p155
        %p416 = pneg %p152
        %s417 = sand.u32 %s168, 1
        %s418 = scalar_lea.sflag [#allocation8], %s417
        %s419 = sand.u32 %s168, 1
        %s420 = smul.addr %s419, 160
        %s421 = scalar_lea.vmem [#allocation7], %s420
        %p422 = pneg %p181
        %p423 = pneg %p178
        %p424 = scmp.lt.s32.totalorder %s33, 4
        %s425 = scalar_select %p424, %s33, 4
        %s426 = scalar_lea.vmem %s6, %s425
        %p427 = pneg %p207
        %p428 = pneg %p204
        %p429 = pneg %p228
        %p430 = pneg %p225
        %p431 = pneg %p249
        %p432 = pneg %p246
        %p433 = pneg %p275
        %p434 = pneg %p272
        %p435 = scmp.lt.s32.totalorder %s32, 1
        %s436 = scalar_select %p435, %s32, 1
        %s437 = smul.addr %s436, 2
        %s438 = scalar_lea.vmem %s9, %s437
        %s439 = smul.u32 2, %s32
        %p440 = scmp.lt.s32.totalorder %s439, 3
        %s441 = scalar_select %p440, %s439, 3
        %s442 = smul.addr %s441, 8
        %s443 = scalar_lea.vmem %s0, %s442
        %s444 = smul.u32 2, %s32
        %p445 = scmp.lt.s32.totalorder %s33, 4
        %s446 = scalar_select %p445, %s33, 4
        %s447 = scalar_lea.vmem %s4, %s446
        %p448 = scmp.lt.s32.totalorder %s33, 4
        %s449 = scalar_select %p448, %s33, 4
        %s450 = scalar_lea.vmem %s6, %s449
        %p451 = scmp.lt.s32.totalorder %s32, 1
        %s452 = scalar_select %p451, %s32, 1
        %s453 = smul.addr %s452, 2
        %s454 = scalar_lea.vmem %s9, %s453
        %p455 = scmp.eq.s32.totalorder %s33, 0
        // Predicated region
        $region65: #{tpu_custom_call.1} parent=55 // pred_check
          %p456 = pneg %p455
        $region66: #{tpu_custom_call.1} parent=55 // pred_check_branch
          %458 = sbr.rel (%p456) target = $region68
        $region67: #{tpu_custom_call.1} parent=55 // pred_region
          %vm459 = vcmask 261120
          %460 = vst.msk [vmem:[#allocation3] sm:$0xff] %vm459, 0.0
          %461 = vst.msk [vmem:[#allocation3 + $0x8] sm:$0xff] %vm459, 0.0
          %462 = vst.msk [vmem:[#allocation3 + $0x10] sm:$0xff] %vm459, 0.0
          %463 = vst.msk [vmem:[#allocation3 + $0x18] sm:$0xff] %vm459, 0.0
          %464 = vst.msk [vmem:[#allocation3 + $0x20] sm:$0xff] %vm459, 0.0
          %465 = vst.msk [vmem:[#allocation3 + $0x28] sm:$0xff] %vm459, 0.0
          %v466 = vld [vmem:[%s443] sm:$0xff]
          %v467 = vld [vmem:[%s443 + $0x8] sm:$0xff]
          %v468 = vld [vmem:[%s1] sm:$0xff]
          %v469 = vld [vmem:[%s1 + $0x8] sm:$0xff]
          %v470 = vld [vmem:[%s1 + $0x10] sm:$0xf]
          %v471 = vld [vmem:[%s2] sm:$0x1]
          %v473 = vlaneseq
          %v474 = vshrl.u32 %v473, 7
          %v475 = vsub.s32 0, %v474
          %v476 = vrot.slane %v471, %v475
          %vm478 = vcmask 162816
          %v480 = vsel %vm478, %v466, 0
          %v483 = vsel %vm478, %v467, 0
          %vm485 = vcmask 1043456
          %v487 = vsel %vm485, %v470, 0
          %489 = vmatprep.subr.mxu0 0.0
          %490 = vmatpush1.msra.mxu0 %v468
          %491 = vmatprep.subr.mxu0 0.0
          %492 = vmatpush1.msra.mxu0 %v469
          %493 = vmatprep.subr.mxu0 0.0
          %494 = vmatpush1.msra.mxu0 %v487
          %495 = vmatprep.subr.mxu0 0.0
          %496 = vmatpush1.msra.mxu0 0.0
          %497 = vmatprep.subr.mxu0 0.0
          %498 = vmatpush1.msra.mxu0 0.0
          %499 = vmatprep.subr.mxu0 0.0
          %500 = vmatpush1.msra.mxu0 0.0
          %501 = vmatprep.subr.mxu0 0.0
          %502 = vmatpush1.msra.mxu0 0.0
          %503 = vmatprep.subr.mxu0 0.0
          %504 = vmatpush1.msra.mxu0 0.0
          %505 = vmatprep.subr.mxu0 0.0
          %506 = vmatpush1.msra.mxu0 0.0
          %507 = vmatprep.subr.mxu0 0.0
          %508 = vmatpush1.msra.mxu0 0.0
          %509 = vmatprep.subr.mxu0 0.0
          %510 = vmatpush1.msra.mxu0 0.0
          %511 = vmatprep.subr.mxu0 0.0
          %512 = vmatpush1.msra.mxu0 0.0
          %513 = vmatprep.subr.mxu0 0.0
          %514 = vmatpush1.msra.mxu0 0.0
          %515 = vmatprep.subr.mxu0 0.0
          %516 = vmatpush1.msra.mxu0 0.0
          %517 = vmatprep.subr.mxu0 0.0
          %518 = vmatpush1.msra.mxu0 0.0
          %519 = vmatprep.subr.mxu0 0.0
          %520 = vmatpush1.msra.mxu0 0.0
          %521 = vmatprep.subr.mxu0 0.0
          %522 = vmatpush1.msra.mxu0 0.0
          %523 = vmatprep.subr.mxu0 0.0
          %524 = vmatpush1.msra.mxu0 0.0
          %525 = vmatprep.subr.mxu0 0.0
          %526 = vmatpush1.msra.mxu0 0.0
          %527 = vmatprep.subr.mxu0 0.0
          %528 = vmatpush1.msra.mxu0 0.0
          %529 = vmatprep.subr.mxu0 0.0
          %530 = vmatpush1.msra.mxu0 0.0
          %531 = vmatprep.subr.mxu0 0.0
          %532 = vmatpush1.msra.mxu0 0.0
          %533 = vmatprep.subr.mxu0 0.0
          %534 = vmatpush1.msra.mxu0 0.0
          %535 = vmatprep.subr.mxu0 0.0
          %536 = vmatpush1.msra.mxu0 0.0
          %537 = vmatprep.subr.mxu0 0.0
          %538 = vmatpush1.msra.mxu0 0.0
          %539 = vmatprep.subr.mxu0 0.0
          %540 = vmatpush1.msra.mxu0 0.0
          %541 = vmatprep.subr.mxu0 0.0
          %542 = vmatpush1.msra.mxu0 0.0
          %543 = vmatprep.subr.mxu0 0.0
          %544 = vmatpush1.msra.mxu0 0.0
          %545 = vmatprep.subr.mxu0 0.0
          %546 = vmatpush1.msra.mxu0 0.0
          %547 = vmatprep.subr.mxu0 0.0
          %548 = vmatpush1.msra.mxu0 0.0
          %549 = vmatprep.subr.mxu0 0.0
          %550 = vmatpush1.msra.mxu0 0.0
          %551 = vmatprep.subr.mxu0 0.0
          %552 = vmatpush1.msra.mxu0 0.0
          %553 = vmatprep.mubr.f32.mxu0 0.0
          %554 = vmatmul.mubr.f32.gmra.mrb[0].mxu0 %v480
          %v555 = vpop.f32.mrb[0].mxu0
          %v556 = vadd.f32 %v476, %v555
          %v557 = vpop.f32.mrb[0].mxu0
          %558 = vmatprep.mubr.f32.mxu0 0.0
          %559 = vmatmul.mubr.f32.gmra.mrb[0].mxu0 %v483
          %v560 = vpop.f32.mrb[0].mxu0
          %v561 = vadd.f32 %v476, %v560
          %v562 = vpop.f32.mrb[0].mxu0
          %563 = vdwg.mxu0
          %564 = vst.msk [vmem:[#allocation2] sm:$0xff] %vm459, %v556
          %565 = vst.msk [vmem:[#allocation2 + $0x8] sm:$0xff] %vm459, %v561
        $region68: #{tpu_custom_call.1} parent=55 // pred_fallthru
          _
        %v566 = vld [vmem:[#allocation2] sm:$0xff]
        %v567 = vld [vmem:[#allocation2 + $0x8] sm:$0xff]
        %v568 = vmax.f32 %v566, 0.0
        %v569 = vmax.f32 %v567, 0.0
        %vm570 = vcmask 261120
        %571 = vst.msk [vmem:[#allocation3 + $0x8] sm:$0xff] %vm570, %v568
        %572 = vst.msk [vmem:[#allocation3 + $0x20] sm:$0xff] %vm570, %v569
        %v573 = vld [vmem:[#allocation3 + $0x6] sm:$0xff]
        %v574 = vld [vmem:[#allocation3 + $0x1e] sm:$0xff]
        %v575 = vld [vmem:[%s380] sm:$0xff]
        %v576 = vld [vmem:[%s380 + $0x8] sm:$0xff]
        %v577 = vld [vmem:[%s380 + $0x10] sm:$0xff]
        %v578 = vld [vmem:[%s380 + $0x18] sm:$0xff]
        %v579 = vld [vmem:[%s447] sm:$0x1]
        %v581 = vlaneseq
        %v582 = vshrl.u32 %v581, 7
        %v583 = vsub.s32 0, %v582
        %v584 = vrot.slane %v579, %v583
        %v587 = vsel %vm570, %v573, 0
        %v590 = vsel %vm570, %v574, 0
        %592 = vmatprep.subr.mxu0 0.0
        %593 = vmatpush1.msra.mxu0 %v575
        %594 = vmatprep.subr.mxu0 0.0
        %595 = vmatpush1.msra.mxu0 %v576
        %596 = vmatprep.subr.mxu0 0.0
        %597 = vmatpush1.msra.mxu0 %v577
        %598 = vmatprep.subr.mxu0 0.0
        %599 = vmatpush1.msra.mxu0 %v578
        %600 = vmatprep.subr.mxu0 0.0
        %601 = vmatpush1.msra.mxu0 0.0
        %602 = vmatprep.subr.mxu0 0.0
        %603 = vmatpush1.msra.mxu0 0.0
        %604 = vmatprep.subr.mxu0 0.0
        %605 = vmatpush1.msra.mxu0 0.0
        %606 = vmatprep.subr.mxu0 0.0
        %607 = vmatpush1.msra.mxu0 0.0
        %608 = vmatprep.subr.mxu0 0.0
        %609 = vmatpush1.msra.mxu0 0.0
        %610 = vmatprep.subr.mxu0 0.0
        %611 = vmatpush1.msra.mxu0 0.0
        %612 = vmatprep.subr.mxu0 0.0
        %613 = vmatpush1.msra.mxu0 0.0
        %614 = vmatprep.subr.mxu0 0.0
        %615 = vmatpush1.msra.mxu0 0.0
        %616 = vmatprep.subr.mxu0 0.0
        %617 = vmatpush1.msra.mxu0 0.0
        %618 = vmatprep.subr.mxu0 0.0
        %619 = vmatpush1.msra.mxu0 0.0
        %620 = vmatprep.subr.mxu0 0.0
        %621 = vmatpush1.msra.mxu0 0.0
        %622 = vmatprep.subr.mxu0 0.0
        %623 = vmatpush1.msra.mxu0 0.0
        %624 = vmatprep.subr.mxu0 0.0
        %625 = vmatpush1.msra.mxu0 0.0
        %626 = vmatprep.subr.mxu0 0.0
        %627 = vmatpush1.msra.mxu0 0.0
        %628 = vmatprep.subr.mxu0 0.0
        %629 = vmatpush1.msra.mxu0 0.0
        %630 = vmatprep.subr.mxu0 0.0
        %631 = vmatpush1.msra.mxu0 0.0
        %632 = vmatprep.subr.mxu0 0.0
        %633 = vmatpush1.msra.mxu0 0.0
        %634 = vmatprep.subr.mxu0 0.0
        %635 = vmatpush1.msra.mxu0 0.0
        %636 = vmatprep.subr.mxu0 0.0
        %637 = vmatpush1.msra.mxu0 0.0
        %638 = vmatprep.subr.mxu0 0.0
        %639 = vmatpush1.msra.mxu0 0.0
        %640 = vmatprep.subr.mxu0 0.0
        %641 = vmatpush1.msra.mxu0 0.0
        %642 = vmatprep.subr.mxu0 0.0
        %643 = vmatpush1.msra.mxu0 0.0
        %644 = vmatprep.subr.mxu0 0.0
        %645 = vmatpush1.msra.mxu0 0.0
        %646 = vmatprep.subr.mxu0 0.0
        %647 = vmatpush1.msra.mxu0 0.0
        %648 = vmatprep.subr.mxu0 0.0
        %649 = vmatpush1.msra.mxu0 0.0
        %650 = vmatprep.subr.mxu0 0.0
        %651 = vmatpush1.msra.mxu0 0.0
        %652 = vmatprep.subr.mxu0 0.0
        %653 = vmatpush1.msra.mxu0 0.0
        %654 = vmatprep.subr.mxu0 0.0
        %655 = vmatpush1.msra.mxu0 0.0
        %656 = vmatprep.mubr.f32.mxu0 0.0
        %657 = vmatmul.mubr.f32.gmra.mrb[0].mxu0 %v587
        %v658 = vpop.f32.mrb[0].mxu0
        %v659 = vadd.f32 %v584, %v658
        %v660 = vpop.f32.mrb[0].mxu0
        %661 = vmatprep.mubr.f32.mxu0 0.0
        %662 = vmatmul.mubr.f32.gmra.mrb[0].mxu0 %v590
        %v663 = vpop.f32.mrb[0].mxu0
        %v664 = vadd.f32 %v584, %v663
        %v665 = vpop.f32.mrb[0].mxu0
        %666 = vdwg.mxu0
        %v667 = vld [vmem:[#allocation3 + $0x7] sm:$0xff]
        %v668 = vld [vmem:[#allocation3 + $0x1f] sm:$0xff]
        %s669 = scalar_lea.vmem %s380, 32 [#allocation5]
        %v670 = vld [vmem:[%s669] sm:$0xff]
        %v671 = vld [vmem:[%s669 + $0x8] sm:$0xff]
        %v672 = vld [vmem:[%s669 + $0x10] sm:$0xff]
        %v673 = vld [vmem:[%s669 + $0x18] sm:$0xff]
        %v675 = vsel %vm570, %v667, 0
        %v678 = vsel %vm570, %v668, 0
        %680 = vmatprep.subr.mxu0 0.0
        %681 = vmatpush1.msra.mxu0 %v670
        %682 = vmatprep.subr.mxu0 0.0
        %683 = vmatpush1.msra.mxu0 %v671
        %684 = vmatprep.subr.mxu0 0.0
        %685 = vmatpush1.msra.mxu0 %v672
        %686 = vmatprep.subr.mxu0 0.0
        %687 = vmatpush1.msra.mxu0 %v673
        %688 = vmatprep.subr.mxu0 0.0
        %689 = vmatpush1.msra.mxu0 0.0
        %690 = vmatprep.subr.mxu0 0.0
        %691 = vmatpush1.msra.mxu0 0.0
        %692 = vmatprep.subr.mxu0 0.0
        %693 = vmatpush1.msra.mxu0 0.0
        %694 = vmatprep.subr.mxu0 0.0
        %695 = vmatpush1.msra.mxu0 0.0
        %696 = vmatprep.subr.mxu0 0.0
        %697 = vmatpush1.msra.mxu0 0.0
        %698 = vmatprep.subr.mxu0 0.0
        %699 = vmatpush1.msra.mxu0 0.0
        %700 = vmatprep.subr.mxu0 0.0
        %701 = vmatpush1.msra.mxu0 0.0
        %702 = vmatprep.subr.mxu0 0.0
        %703 = vmatpush1.msra.mxu0 0.0
        %704 = vmatprep.subr.mxu0 0.0
        %705 = vmatpush1.msra.mxu0 0.0
        %706 = vmatprep.subr.mxu0 0.0
        %707 = vmatpush1.msra.mxu0 0.0
        %708 = vmatprep.subr.mxu0 0.0
        %709 = vmatpush1.msra.mxu0 0.0
        %710 = vmatprep.subr.mxu0 0.0
        %711 = vmatpush1.msra.mxu0 0.0
        %712 = vmatprep.subr.mxu0 0.0
        %713 = vmatpush1.msra.mxu0 0.0
        %714 = vmatprep.subr.mxu0 0.0
        %715 = vmatpush1.msra.mxu0 0.0
        %716 = vmatprep.subr.mxu0 0.0
        %717 = vmatpush1.msra.mxu0 0.0
        %718 = vmatprep.subr.mxu0 0.0
        %719 = vmatpush1.msra.mxu0 0.0
        %720 = vmatprep.subr.mxu0 0.0
        %721 = vmatpush1.msra.mxu0 0.0
        %722 = vmatprep.subr.mxu0 0.0
        %723 = vmatpush1.msra.mxu0 0.0
        %724 = vmatprep.subr.mxu0 0.0
        %725 = vmatpush1.msra.mxu0 0.0
        %726 = vmatprep.subr.mxu0 0.0
        %727 = vmatpush1.msra.mxu0 0.0
        %728 = vmatprep.subr.mxu0 0.0
        %729 = vmatpush1.msra.mxu0 0.0
        %730 = vmatprep.subr.mxu0 0.0
        %731 = vmatpush1.msra.mxu0 0.0
        %732 = vmatprep.subr.mxu0 0.0
        %733 = vmatpush1.msra.mxu0 0.0
        %734 = vmatprep.subr.mxu0 0.0
        %735 = vmatpush1.msra.mxu0 0.0
        %736 = vmatprep.subr.mxu0 0.0
        %737 = vmatpush1.msra.mxu0 0.0
        %738 = vmatprep.subr.mxu0 0.0
        %739 = vmatpush1.msra.mxu0 0.0
        %740 = vmatprep.subr.mxu0 0.0
        %741 = vmatpush1.msra.mxu0 0.0
        %742 = vmatprep.subr.mxu0 0.0
        %743 = vmatpush1.msra.mxu0 0.0
        %744 = vmatprep.mubr.f32.mxu0 0.0
        %745 = vmatmul.mubr.f32.gmra.mrb[0].mxu0 %v675
        %v746 = vpop.f32.mrb[0].mxu0
        %v747 = vadd.f32 0.0, %v746
        %v748 = vpop.f32.mrb[0].mxu0
        %749 = vmatprep.mubr.f32.mxu0 0.0
        %750 = vmatmul.mubr.f32.gmra.mrb[0].mxu0 %v678
        %v751 = vpop.f32.mrb[0].mxu0
        %v752 = vadd.f32 0.0, %v751
        %v753 = vpop.f32.mrb[0].mxu0
        %754 = vdwg.mxu0
        %v755 = vadd.f32 %v659, %v747
        %v756 = vadd.f32 %v664, %v752
        %v757 = vld [vmem:[#allocation3 + $0x8] sm:$0xff]
        %v758 = vld [vmem:[#allocation3 + $0x20] sm:$0xff]
        %s759 = scalar_lea.vmem %s380, 64 [#allocation5]
        %v760 = vld [vmem:[%s759] sm:$0xff]
        %v761 = vld [vmem:[%s759 + $0x8] sm:$0xff]
        %v762 = vld [vmem:[%s759 + $0x10] sm:$0xff]
        %v763 = vld [vmem:[%s759 + $0x18] sm:$0xff]
        %v765 = vsel %vm570, %v757, 0
        %v768 = vsel %vm570, %v758, 0
        %770 = vmatprep.subr.mxu0 0.0
        %771 = vmatpush1.msra.mxu0 %v760
        %772 = vmatprep.subr.mxu0 0.0
        %773 = vmatpush1.msra.mxu0 %v761
        %774 = vmatprep.subr.mxu0 0.0
        %775 = vmatpush1.msra.mxu0 %v762
        %776 = vmatprep.subr.mxu0 0.0
        %777 = vmatpush1.msra.mxu0 %v763
        %778 = vmatprep.subr.mxu0 0.0
        %779 = vmatpush1.msra.mxu0 0.0
        %780 = vmatprep.subr.mxu0 0.0
        %781 = vmatpush1.msra.mxu0 0.0
        %782 = vmatprep.subr.mxu0 0.0
        %783 = vmatpush1.msra.mxu0 0.0
        %784 = vmatprep.subr.mxu0 0.0
        %785 = vmatpush1.msra.mxu0 0.0
        %786 = vmatprep.subr.mxu0 0.0
        %787 = vmatpush1.msra.mxu0 0.0
        %788 = vmatprep.subr.mxu0 0.0
        %789 = vmatpush1.msra.mxu0 0.0
        %790 = vmatprep.subr.mxu0 0.0
        %791 = vmatpush1.msra.mxu0 0.0
        %792 = vmatprep.subr.mxu0 0.0
        %793 = vmatpush1.msra.mxu0 0.0
        %794 = vmatprep.subr.mxu0 0.0
        %795 = vmatpush1.msra.mxu0 0.0
        %796 = vmatprep.subr.mxu0 0.0
        %797 = vmatpush1.msra.mxu0 0.0
        %798 = vmatprep.subr.mxu0 0.0
        %799 = vmatpush1.msra.mxu0 0.0
        %800 = vmatprep.subr.mxu0 0.0
        %801 = vmatpush1.msra.mxu0 0.0
        %802 = vmatprep.subr.mxu0 0.0
        %803 = vmatpush1.msra.mxu0 0.0
        %804 = vmatprep.subr.mxu0 0.0
        %805 = vmatpush1.msra.mxu0 0.0
        %806 = vmatprep.subr.mxu0 0.0
        %807 = vmatpush1.msra.mxu0 0.0
        %808 = vmatprep.subr.mxu0 0.0
        %809 = vmatpush1.msra.mxu0 0.0
        %810 = vmatprep.subr.mxu0 0.0
        %811 = vmatpush1.msra.mxu0 0.0
        %812 = vmatprep.subr.mxu0 0.0
        %813 = vmatpush1.msra.mxu0 0.0
        %814 = vmatprep.subr.mxu0 0.0
        %815 = vmatpush1.msra.mxu0 0.0
        %816 = vmatprep.subr.mxu0 0.0
        %817 = vmatpush1.msra.mxu0 0.0
        %818 = vmatprep.subr.mxu0 0.0
        %819 = vmatpush1.msra.mxu0 0.0
        %820 = vmatprep.subr.mxu0 0.0
        %821 = vmatpush1.msra.mxu0 0.0
        %822 = vmatprep.subr.mxu0 0.0
        %823 = vmatpush1.msra.mxu0 0.0
        %824 = vmatprep.subr.mxu0 0.0
        %825 = vmatpush1.msra.mxu0 0.0
        %826 = vmatprep.subr.mxu0 0.0
        %827 = vmatpush1.msra.mxu0 0.0
        %828 = vmatprep.subr.mxu0 0.0
        %829 = vmatpush1.msra.mxu0 0.0
        %830 = vmatprep.subr.mxu0 0.0
        %831 = vmatpush1.msra.mxu0 0.0
        %832 = vmatprep.subr.mxu0 0.0
        %833 = vmatpush1.msra.mxu0 0.0
        %834 = vmatprep.mubr.f32.mxu0 0.0
        %835 = vmatmul.mubr.f32.gmra.mrb[0].mxu0 %v765
        %v836 = vpop.f32.mrb[0].mxu0
        %v837 = vadd.f32 0.0, %v836
        %v838 = vpop.f32.mrb[0].mxu0
        %839 = vmatprep.mubr.f32.mxu0 0.0
        %840 = vmatmul.mubr.f32.gmra.mrb[0].mxu0 %v768
        %v841 = vpop.f32.mrb[0].mxu0
        %v842 = vadd.f32 0.0, %v841
        %v843 = vpop.f32.mrb[0].mxu0
        %844 = vdwg.mxu0
        %v845 = vadd.f32 %v755, %v837
        %v846 = vadd.f32 %v756, %v842
        %v847 = vld [vmem:[#allocation3 + $0x9] sm:$0xff]
        %v848 = vld [vmem:[#allocation3 + $0x21] sm:$0xff]
        %s849 = scalar_lea.vmem %s380, 96 [#allocation5]
        %v850 = vld [vmem:[%s849] sm:$0xff]
        %v851 = vld [vmem:[%s849 + $0x8] sm:$0xff]
        %v852 = vld [vmem:[%s849 + $0x10] sm:$0xff]
        %v853 = vld [vmem:[%s849 + $0x18] sm:$0xff]
        %v855 = vsel %vm570, %v847, 0
        %v858 = vsel %vm570, %v848, 0
        %860 = vmatprep.subr.mxu0 0.0
        %861 = vmatpush1.msra.mxu0 %v850
        %862 = vmatprep.subr.mxu0 0.0
        %863 = vmatpush1.msra.mxu0 %v851
        %864 = vmatprep.subr.mxu0 0.0
        %865 = vmatpush1.msra.mxu0 %v852
        %866 = vmatprep.subr.mxu0 0.0
        %867 = vmatpush1.msra.mxu0 %v853
        %868 = vmatprep.subr.mxu0 0.0
        %869 = vmatpush1.msra.mxu0 0.0
        %870 = vmatprep.subr.mxu0 0.0
        %871 = vmatpush1.msra.mxu0 0.0
        %872 = vmatprep.subr.mxu0 0.0
        %873 = vmatpush1.msra.mxu0 0.0
        %874 = vmatprep.subr.mxu0 0.0
        %875 = vmatpush1.msra.mxu0 0.0
        %876 = vmatprep.subr.mxu0 0.0
        %877 = vmatpush1.msra.mxu0 0.0
        %878 = vmatprep.subr.mxu0 0.0
        %879 = vmatpush1.msra.mxu0 0.0
        %880 = vmatprep.subr.mxu0 0.0
        %881 = vmatpush1.msra.mxu0 0.0
        %882 = vmatprep.subr.mxu0 0.0
        %883 = vmatpush1.msra.mxu0 0.0
        %884 = vmatprep.subr.mxu0 0.0
        %885 = vmatpush1.msra.mxu0 0.0
        %886 = vmatprep.subr.mxu0 0.0
        %887 = vmatpush1.msra.mxu0 0.0
        %888 = vmatprep.subr.mxu0 0.0
        %889 = vmatpush1.msra.mxu0 0.0
        %890 = vmatprep.subr.mxu0 0.0
        %891 = vmatpush1.msra.mxu0 0.0
        %892 = vmatprep.subr.mxu0 0.0
        %893 = vmatpush1.msra.mxu0 0.0
        %894 = vmatprep.subr.mxu0 0.0
        %895 = vmatpush1.msra.mxu0 0.0
        %896 = vmatprep.subr.mxu0 0.0
        %897 = vmatpush1.msra.mxu0 0.0
        %898 = vmatprep.subr.mxu0 0.0
        %899 = vmatpush1.msra.mxu0 0.0
        %900 = vmatprep.subr.mxu0 0.0
        %901 = vmatpush1.msra.mxu0 0.0
        %902 = vmatprep.subr.mxu0 0.0
        %903 = vmatpush1.msra.mxu0 0.0
        %904 = vmatprep.subr.mxu0 0.0
        %905 = vmatpush1.msra.mxu0 0.0
        %906 = vmatprep.subr.mxu0 0.0
        %907 = vmatpush1.msra.mxu0 0.0
        %908 = vmatprep.subr.mxu0 0.0
        %909 = vmatpush1.msra.mxu0 0.0
        %910 = vmatprep.subr.mxu0 0.0
        %911 = vmatpush1.msra.mxu0 0.0
        %912 = vmatprep.subr.mxu0 0.0
        %913 = vmatpush1.msra.mxu0 0.0
        %914 = vmatprep.subr.mxu0 0.0
        %915 = vmatpush1.msra.mxu0 0.0
        %916 = vmatprep.subr.mxu0 0.0
        %917 = vmatpush1.msra.mxu0 0.0
        %918 = vmatprep.subr.mxu0 0.0
        %919 = vmatpush1.msra.mxu0 0.0
        %920 = vmatprep.subr.mxu0 0.0
        %921 = vmatpush1.msra.mxu0 0.0
        %922 = vmatprep.subr.mxu0 0.0
        %923 = vmatpush1.msra.mxu0 0.0
        %924 = vmatprep.mubr.f32.mxu0 0.0
        %925 = vmatmul.mubr.f32.gmra.mrb[0].mxu0 %v855
        %v926 = vpop.f32.mrb[0].mxu0
        %v927 = vadd.f32 0.0, %v926
        %v928 = vpop.f32.mrb[0].mxu0
        %929 = vmatprep.mubr.f32.mxu0 0.0
        %930 = vmatmul.mubr.f32.gmra.mrb[0].mxu0 %v858
        %v931 = vpop.f32.mrb[0].mxu0
        %v932 = vadd.f32 0.0, %v931
        %v933 = vpop.f32.mrb[0].mxu0
        %934 = vdwg.mxu0
        %v935 = vadd.f32 %v845, %v927
        %v936 = vadd.f32 %v846, %v932
        %v937 = vld [vmem:[#allocation3 + $0xa] sm:$0xff]
        %v938 = vld [vmem:[#allocation3 + $0x22] sm:$0xff]
        %s939 = scalar_lea.vmem %s380, 128 [#allocation5]
        %v940 = vld [vmem:[%s939] sm:$0xff]
        %v941 = vld [vmem:[%s939 + $0x8] sm:$0xff]
        %v942 = vld [vmem:[%s939 + $0x10] sm:$0xff]
        %v943 = vld [vmem:[%s939 + $0x18] sm:$0xff]
        %v945 = vsel %vm570, %v937, 0
        %v948 = vsel %vm570, %v938, 0
        %950 = vmatprep.subr.mxu0 0.0
        %951 = vmatpush1.msra.mxu0 %v940
        %952 = vmatprep.subr.mxu0 0.0
        %953 = vmatpush1.msra.mxu0 %v941
        %954 = vmatprep.subr.mxu0 0.0
        %955 = vmatpush1.msra.mxu0 %v942
        %956 = vmatprep.subr.mxu0 0.0
        %957 = vmatpush1.msra.mxu0 %v943
        %958 = vmatprep.subr.mxu0 0.0
        %959 = vmatpush1.msra.mxu0 0.0
        %960 = vmatprep.subr.mxu0 0.0
        %961 = vmatpush1.msra.mxu0 0.0
        %962 = vmatprep.subr.mxu0 0.0
        %963 = vmatpush1.msra.mxu0 0.0
        %964 = vmatprep.subr.mxu0 0.0
        %965 = vmatpush1.msra.mxu0 0.0
        %966 = vmatprep.subr.mxu0 0.0
        %967 = vmatpush1.msra.mxu0 0.0
        %968 = vmatprep.subr.mxu0 0.0
        %969 = vmatpush1.msra.mxu0 0.0
        %970 = vmatprep.subr.mxu0 0.0
        %971 = vmatpush1.msra.mxu0 0.0
        %972 = vmatprep.subr.mxu0 0.0
        %973 = vmatpush1.msra.mxu0 0.0
        %974 = vmatprep.subr.mxu0 0.0
        %975 = vmatpush1.msra.mxu0 0.0
        %976 = vmatprep.subr.mxu0 0.0
        %977 = vmatpush1.msra.mxu0 0.0
        %978 = vmatprep.subr.mxu0 0.0
        %979 = vmatpush1.msra.mxu0 0.0
        %980 = vmatprep.subr.mxu0 0.0
        %981 = vmatpush1.msra.mxu0 0.0
        %982 = vmatprep.subr.mxu0 0.0
        %983 = vmatpush1.msra.mxu0 0.0
        %984 = vmatprep.subr.mxu0 0.0
        %985 = vmatpush1.msra.mxu0 0.0
        %986 = vmatprep.subr.mxu0 0.0
        %987 = vmatpush1.msra.mxu0 0.0
        %988 = vmatprep.subr.mxu0 0.0
        %989 = vmatpush1.msra.mxu0 0.0
        %990 = vmatprep.subr.mxu0 0.0
        %991 = vmatpush1.msra.mxu0 0.0
        %992 = vmatprep.subr.mxu0 0.0
        %993 = vmatpush1.msra.mxu0 0.0
        %994 = vmatprep.subr.mxu0 0.0
        %995 = vmatpush1.msra.mxu0 0.0
        %996 = vmatprep.subr.mxu0 0.0
        %997 = vmatpush1.msra.mxu0 0.0
        %998 = vmatprep.subr.mxu0 0.0
        %999 = vmatpush1.msra.mxu0 0.0
        %1000 = vmatprep.subr.mxu0 0.0
        %1001 = vmatpush1.msra.mxu0 0.0
        %1002 = vmatprep.subr.mxu0 0.0
        %1003 = vmatpush1.msra.mxu0 0.0
        %1004 = vmatprep.subr.mxu0 0.0
        %1005 = vmatpush1.msra.mxu0 0.0
        %1006 = vmatprep.subr.mxu0 0.0
        %1007 = vmatpush1.msra.mxu0 0.0
        %1008 = vmatprep.subr.mxu0 0.0
        %1009 = vmatpush1.msra.mxu0 0.0
        %1010 = vmatprep.subr.mxu0 0.0
        %1011 = vmatpush1.msra.mxu0 0.0
        %1012 = vmatprep.subr.mxu0 0.0
        %1013 = vmatpush1.msra.mxu0 0.0
        %1014 = vmatprep.mubr.f32.mxu0 0.0
        %1015 = vmatmul.mubr.f32.gmra.mrb[0].mxu0 %v945
        %v1016 = vpop.f32.mrb[0].mxu0
        %v1017 = vadd.f32 0.0, %v1016
        %v1018 = vpop.f32.mrb[0].mxu0
        %1019 = vmatprep.mubr.f32.mxu0 0.0
        %1020 = vmatmul.mubr.f32.gmra.mrb[0].mxu0 %v948
        %v1021 = vpop.f32.mrb[0].mxu0
        %v1022 = vadd.f32 0.0, %v1021
        %v1023 = vpop.f32.mrb[0].mxu0
        %1024 = vdwg.mxu0
        %v1025 = vadd.f32 %v935, %v1017
        %v1026 = vadd.f32 %v936, %v1022
        %v1027 = vmax.f32 %v1025, 0.0
        %v1028 = vmax.f32 %v1026, 0.0
        %1029 = vst.msk [vmem:[#allocation3 + $0x8] sm:$0xff] %vm570, %v1027
        %1030 = vst.msk [vmem:[#allocation3 + $0x20] sm:$0xff] %vm570, %v1028
        %v1031 = vld [vmem:[#allocation3 + $0x6] sm:$0xff]
        %v1032 = vld [vmem:[#allocation3 + $0x1e] sm:$0xff]
        %v1033 = vld [vmem:[%s389] sm:$0xff]
        %v1034 = vld [vmem:[%s389 + $0x8] sm:$0xff]
        %v1035 = vld [vmem:[%s389 + $0x10] sm:$0xff]
        %v1036 = vld [vmem:[%s389 + $0x18] sm:$0xff]
        %v1037 = vld [vmem:[%s450] sm:$0x1]
        %v1039 = vlaneseq
        %v1040 = vshrl.u32 %v1039, 7
        %v1041 = vsub.s32 0, %v1040
        %v1042 = vrot.slane %v1037, %v1041
        %v1045 = vsel %vm570, %v1031, 0
        %v1048 = vsel %vm570, %v1032, 0
        %1050 = vmatprep.subr.mxu0 0.0
        %1051 = vmatpush1.msra.mxu0 %v1033
        %1052 = vmatprep.subr.mxu0 0.0
        %1053 = vmatpush1.msra.mxu0 %v1034
        %1054 = vmatprep.subr.mxu0 0.0
        %1055 = vmatpush1.msra.mxu0 %v1035
        %1056 = vmatprep.subr.mxu0 0.0
        %1057 = vmatpush1.msra.mxu0 %v1036
        %1058 = vmatprep.subr.mxu0 0.0
        %1059 = vmatpush1.msra.mxu0 0.0
        %1060 = vmatprep.subr.mxu0 0.0
        %1061 = vmatpush1.msra.mxu0 0.0
        %1062 = vmatprep.subr.mxu0 0.0
        %1063 = vmatpush1.msra.mxu0 0.0
        %1064 = vmatprep.subr.mxu0 0.0
        %1065 = vmatpush1.msra.mxu0 0.0
        %1066 = vmatprep.subr.mxu0 0.0
        %1067 = vmatpush1.msra.mxu0 0.0
        %1068 = vmatprep.subr.mxu0 0.0
        %1069 = vmatpush1.msra.mxu0 0.0
        %1070 = vmatprep.subr.mxu0 0.0
        %1071 = vmatpush1.msra.mxu0 0.0
        %1072 = vmatprep.subr.mxu0 0.0
        %1073 = vmatpush1.msra.mxu0 0.0
        %1074 = vmatprep.subr.mxu0 0.0
        %1075 = vmatpush1.msra.mxu0 0.0
        %1076 = vmatprep.subr.mxu0 0.0
        %1077 = vmatpush1.msra.mxu0 0.0
        %1078 = vmatprep.subr.mxu0 0.0
        %1079 = vmatpush1.msra.mxu0 0.0
        %1080 = vmatprep.subr.mxu0 0.0
        %1081 = vmatpush1.msra.mxu0 0.0
        %1082 = vmatprep.subr.mxu0 0.0
        %1083 = vmatpush1.msra.mxu0 0.0
        %1084 = vmatprep.subr.mxu0 0.0
        %1085 = vmatpush1.msra.mxu0 0.0
        %1086 = vmatprep.subr.mxu0 0.0
        %1087 = vmatpush1.msra.mxu0 0.0
        %1088 = vmatprep.subr.mxu0 0.0
        %1089 = vmatpush1.msra.mxu0 0.0
        %1090 = vmatprep.subr.mxu0 0.0
        %1091 = vmatpush1.msra.mxu0 0.0
        %1092 = vmatprep.subr.mxu0 0.0
        %1093 = vmatpush1.msra.mxu0 0.0
        %1094 = vmatprep.subr.mxu0 0.0
        %1095 = vmatpush1.msra.mxu0 0.0
        %1096 = vmatprep.subr.mxu0 0.0
        %1097 = vmatpush1.msra.mxu0 0.0
        %1098 = vmatprep.subr.mxu0 0.0
        %1099 = vmatpush1.msra.mxu0 0.0
        %1100 = vmatprep.subr.mxu0 0.0
        %1101 = vmatpush1.msra.mxu0 0.0
        %1102 = vmatprep.subr.mxu0 0.0
        %1103 = vmatpush1.msra.mxu0 0.0
        %1104 = vmatprep.subr.mxu0 0.0
        %1105 = vmatpush1.msra.mxu0 0.0
        %1106 = vmatprep.subr.mxu0 0.0
        %1107 = vmatpush1.msra.mxu0 0.0
        %1108 = vmatprep.subr.mxu0 0.0
        %1109 = vmatpush1.msra.mxu0 0.0
        %1110 = vmatprep.subr.mxu0 0.0
        %1111 = vmatpush1.msra.mxu0 0.0
        %1112 = vmatprep.subr.mxu0 0.0
        %1113 = vmatpush1.msra.mxu0 0.0
        %1114 = vmatprep.mubr.f32.mxu0 0.0
        %1115 = vmatmul.mubr.f32.gmra.mrb[0].mxu0 %v1045
        %v1116 = vpop.f32.mrb[0].mxu0
        %v1117 = vadd.f32 %v1042, %v1116
        %v1118 = vpop.f32.mrb[0].mxu0
        %1119 = vmatprep.mubr.f32.mxu0 0.0
        %1120 = vmatmul.mubr.f32.gmra.mrb[0].mxu0 %v1048
        %v1121 = vpop.f32.mrb[0].mxu0
        %v1122 = vadd.f32 %v1042, %v1121
        %v1123 = vpop.f32.mrb[0].mxu0
        %1124 = vdwg.mxu0
        %v1125 = vld [vmem:[#allocation3 + $0x7] sm:$0xff]
        %v1126 = vld [vmem:[#allocation3 + $0x1f] sm:$0xff]
        %s1127 = scalar_lea.vmem %s389, 32 [#allocation7]
        %v1128 = vld [vmem:[%s1127] sm:$0xff]
        %v1129 = vld [vmem:[%s1127 + $0x8] sm:$0xff]
        %v1130 = vld [vmem:[%s1127 + $0x10] sm:$0xff]
        %v1131 = vld [vmem:[%s1127 + $0x18] sm:$0xff]
        %v1133 = vsel %vm570, %v1125, 0
        %v1136 = vsel %vm570, %v1126, 0
        %1138 = vmatprep.subr.mxu0 0.0
        %1139 = vmatpush1.msra.mxu0 %v1128
        %1140 = vmatprep.subr.mxu0 0.0
        %1141 = vmatpush1.msra.mxu0 %v1129
        %1142 = vmatprep.subr.mxu0 0.0
        %1143 = vmatpush1.msra.mxu0 %v1130
        %1144 = vmatprep.subr.mxu0 0.0
        %1145 = vmatpush1.msra.mxu0 %v1131
        %1146 = vmatprep.subr.mxu0 0.0
        %1147 = vmatpush1.msra.mxu0 0.0
        %1148 = vmatprep.subr.mxu0 0.0
        %1149 = vmatpush1.msra.mxu0 0.0
        %1150 = vmatprep.subr.mxu0 0.0
        %1151 = vmatpush1.msra.mxu0 0.0
        %1152 = vmatprep.subr.mxu0 0.0
        %1153 = vmatpush1.msra.mxu0 0.0
        %1154 = vmatprep.subr.mxu0 0.0
        %1155 = vmatpush1.msra.mxu0 0.0
        %1156 = vmatprep.subr.mxu0 0.0
        %1157 = vmatpush1.msra.mxu0 0.0
        %1158 = vmatprep.subr.mxu0 0.0
        %1159 = vmatpush1.msra.mxu0 0.0
        %1160 = vmatprep.subr.mxu0 0.0
        %1161 = vmatpush1.msra.mxu0 0.0
        %1162 = vmatprep.subr.mxu0 0.0
        %1163 = vmatpush1.msra.mxu0 0.0
        %1164 = vmatprep.subr.mxu0 0.0
        %1165 = vmatpush1.msra.mxu0 0.0
        %1166 = vmatprep.subr.mxu0 0.0
        %1167 = vmatpush1.msra.mxu0 0.0
        %1168 = vmatprep.subr.mxu0 0.0
        %1169 = vmatpush1.msra.mxu0 0.0
        %1170 = vmatprep.subr.mxu0 0.0
        %1171 = vmatpush1.msra.mxu0 0.0
        %1172 = vmatprep.subr.mxu0 0.0
        %1173 = vmatpush1.msra.mxu0 0.0
        %1174 = vmatprep.subr.mxu0 0.0
        %1175 = vmatpush1.msra.mxu0 0.0
        %1176 = vmatprep.subr.mxu0 0.0
        %1177 = vmatpush1.msra.mxu0 0.0
        %1178 = vmatprep.subr.mxu0 0.0
        %1179 = vmatpush1.msra.mxu0 0.0
        %1180 = vmatprep.subr.mxu0 0.0
        %1181 = vmatpush1.msra.mxu0 0.0
        %1182 = vmatprep.subr.mxu0 0.0
        %1183 = vmatpush1.msra.mxu0 0.0
        %1184 = vmatprep.subr.mxu0 0.0
        %1185 = vmatpush1.msra.mxu0 0.0
        %1186 = vmatprep.subr.mxu0 0.0
        %1187 = vmatpush1.msra.mxu0 0.0
        %1188 = vmatprep.subr.mxu0 0.0
        %1189 = vmatpush1.msra.mxu0 0.0
        %1190 = vmatprep.subr.mxu0 0.0
        %1191 = vmatpush1.msra.mxu0 0.0
        %1192 = vmatprep.subr.mxu0 0.0
        %1193 = vmatpush1.msra.mxu0 0.0
        %1194 = vmatprep.subr.mxu0 0.0
        %1195 = vmatpush1.msra.mxu0 0.0
        %1196 = vmatprep.subr.mxu0 0.0
        %1197 = vmatpush1.msra.mxu0 0.0
        %1198 = vmatprep.subr.mxu0 0.0
        %1199 = vmatpush1.msra.mxu0 0.0
        %1200 = vmatprep.subr.mxu0 0.0
        %1201 = vmatpush1.msra.mxu0 0.0
        %1202 = vmatprep.mubr.f32.mxu0 0.0
        %1203 = vmatmul.mubr.f32.gmra.mrb[0].mxu0 %v1133
        %v1204 = vpop.f32.mrb[0].mxu0
        %v1205 = vadd.f32 0.0, %v1204
        %v1206 = vpop.f32.mrb[0].mxu0
        %1207 = vmatprep.mubr.f32.mxu0 0.0
        %1208 = vmatmul.mubr.f32.gmra.mrb[0].mxu0 %v1136
        %v1209 = vpop.f32.mrb[0].mxu0
        %v1210 = vadd.f32 0.0, %v1209
        %v1211 = vpop.f32.mrb[0].mxu0
        %1212 = vdwg.mxu0
        %v1213 = vadd.f32 %v1117, %v1205
        %v1214 = vadd.f32 %v1122, %v1210
        %v1215 = vld [vmem:[#allocation3 + $0x8] sm:$0xff]
        %v1216 = vld [vmem:[#allocation3 + $0x20] sm:$0xff]
        %s1217 = scalar_lea.vmem %s389, 64 [#allocation7]
        %v1218 = vld [vmem:[%s1217] sm:$0xff]
        %v1219 = vld [vmem:[%s1217 + $0x8] sm:$0xff]
        %v1220 = vld [vmem:[%s1217 + $0x10] sm:$0xff]
        %v1221 = vld [vmem:[%s1217 + $0x18] sm:$0xff]
        %v1223 = vsel %vm570, %v1215, 0
        %v1226 = vsel %vm570, %v1216, 0
        %1228 = vmatprep.subr.mxu0 0.0
        %1229 = vmatpush1.msra.mxu0 %v1218
        %1230 = vmatprep.subr.mxu0 0.0
        %1231 = vmatpush1.msra.mxu0 %v1219
        %1232 = vmatprep.subr.mxu0 0.0
        %1233 = vmatpush1.msra.mxu0 %v1220
        %1234 = vmatprep.subr.mxu0 0.0
        %1235 = vmatpush1.msra.mxu0 %v1221
        %1236 = vmatprep.subr.mxu0 0.0
        %1237 = vmatpush1.msra.mxu0 0.0
        %1238 = vmatprep.subr.mxu0 0.0
        %1239 = vmatpush1.msra.mxu0 0.0
        %1240 = vmatprep.subr.mxu0 0.0
        %1241 = vmatpush1.msra.mxu0 0.0
        %1242 = vmatprep.subr.mxu0 0.0
        %1243 = vmatpush1.msra.mxu0 0.0
        %1244 = vmatprep.subr.mxu0 0.0
        %1245 = vmatpush1.msra.mxu0 0.0
        %1246 = vmatprep.subr.mxu0 0.0
        %1247 = vmatpush1.msra.mxu0 0.0
        %1248 = vmatprep.subr.mxu0 0.0
        %1249 = vmatpush1.msra.mxu0 0.0
        %1250 = vmatprep.subr.mxu0 0.0
        %1251 = vmatpush1.msra.mxu0 0.0
        %1252 = vmatprep.subr.mxu0 0.0
        %1253 = vmatpush1.msra.mxu0 0.0
        %1254 = vmatprep.subr.mxu0 0.0
        %1255 = vmatpush1.msra.mxu0 0.0
        %1256 = vmatprep.subr.mxu0 0.0
        %1257 = vmatpush1.msra.mxu0 0.0
        %1258 = vmatprep.subr.mxu0 0.0
        %1259 = vmatpush1.msra.mxu0 0.0
        %1260 = vmatprep.subr.mxu0 0.0
        %1261 = vmatpush1.msra.mxu0 0.0
        %1262 = vmatprep.subr.mxu0 0.0
        %1263 = vmatpush1.msra.mxu0 0.0
        %1264 = vmatprep.subr.mxu0 0.0
        %1265 = vmatpush1.msra.mxu0 0.0
        %1266 = vmatprep.subr.mxu0 0.0
        %1267 = vmatpush1.msra.mxu0 0.0
        %1268 = vmatprep.subr.mxu0 0.0
        %1269 = vmatpush1.msra.mxu0 0.0
        %1270 = vmatprep.subr.mxu0 0.0
        %1271 = vmatpush1.msra.mxu0 0.0
        %1272 = vmatprep.subr.mxu0 0.0
        %1273 = vmatpush1.msra.mxu0 0.0
        %1274 = vmatprep.subr.mxu0 0.0
        %1275 = vmatpush1.msra.mxu0 0.0
        %1276 = vmatprep.subr.mxu0 0.0
        %1277 = vmatpush1.msra.mxu0 0.0
        %1278 = vmatprep.subr.mxu0 0.0
        %1279 = vmatpush1.msra.mxu0 0.0
        %1280 = vmatprep.subr.mxu0 0.0
        %1281 = vmatpush1.msra.mxu0 0.0
        %1282 = vmatprep.subr.mxu0 0.0
        %1283 = vmatpush1.msra.mxu0 0.0
        %1284 = vmatprep.subr.mxu0 0.0
        %1285 = vmatpush1.msra.mxu0 0.0
        %1286 = vmatprep.subr.mxu0 0.0
        %1287 = vmatpush1.msra.mxu0 0.0
        %1288 = vmatprep.subr.mxu0 0.0
        %1289 = vmatpush1.msra.mxu0 0.0
        %1290 = vmatprep.subr.mxu0 0.0
        %1291 = vmatpush1.msra.mxu0 0.0
        %1292 = vmatprep.mubr.f32.mxu0 0.0
        %1293 = vmatmul.mubr.f32.gmra.mrb[0].mxu0 %v1223
        %v1294 = vpop.f32.mrb[0].mxu0
        %v1295 = vadd.f32 0.0, %v1294
        %v1296 = vpop.f32.mrb[0].mxu0
        %1297 = vmatprep.mubr.f32.mxu0 0.0
        %1298 = vmatmul.mubr.f32.gmra.mrb[0].mxu0 %v1226
        %v1299 = vpop.f32.mrb[0].mxu0
        %v1300 = vadd.f32 0.0, %v1299
        %v1301 = vpop.f32.mrb[0].mxu0
        %1302 = vdwg.mxu0
        %v1303 = vadd.f32 %v1213, %v1295
        %v1304 = vadd.f32 %v1214, %v1300
        %v1305 = vld [vmem:[#allocation3 + $0x9] sm:$0xff]
        %v1306 = vld [vmem:[#allocation3 + $0x21] sm:$0xff]
        %s1307 = scalar_lea.vmem %s389, 96 [#allocation7]
        %v1308 = vld [vmem:[%s1307] sm:$0xff]
        %v1309 = vld [vmem:[%s1307 + $0x8] sm:$0xff]
        %v1310 = vld [vmem:[%s1307 + $0x10] sm:$0xff]
        %v1311 = vld [vmem:[%s1307 + $0x18] sm:$0xff]
        %v1313 = vsel %vm570, %v1305, 0
        %v1316 = vsel %vm570, %v1306, 0
        %1318 = vmatprep.subr.mxu0 0.0
        %1319 = vmatpush1.msra.mxu0 %v1308
        %1320 = vmatprep.subr.mxu0 0.0
        %1321 = vmatpush1.msra.mxu0 %v1309
        %1322 = vmatprep.subr.mxu0 0.0
        %1323 = vmatpush1.msra.mxu0 %v1310
        %1324 = vmatprep.subr.mxu0 0.0
        %1325 = vmatpush1.msra.mxu0 %v1311
        %1326 = vmatprep.subr.mxu0 0.0
        %1327 = vmatpush1.msra.mxu0 0.0
        %1328 = vmatprep.subr.mxu0 0.0
        %1329 = vmatpush1.msra.mxu0 0.0
        %1330 = vmatprep.subr.mxu0 0.0
        %1331 = vmatpush1.msra.mxu0 0.0
        %1332 = vmatprep.subr.mxu0 0.0
        %1333 = vmatpush1.msra.mxu0 0.0
        %1334 = vmatprep.subr.mxu0 0.0
        %1335 = vmatpush1.msra.mxu0 0.0
        %1336 = vmatprep.subr.mxu0 0.0
        %1337 = vmatpush1.msra.mxu0 0.0
        %1338 = vmatprep.subr.mxu0 0.0
        %1339 = vmatpush1.msra.mxu0 0.0
        %1340 = vmatprep.subr.mxu0 0.0
        %1341 = vmatpush1.msra.mxu0 0.0
        %1342 = vmatprep.subr.mxu0 0.0
        %1343 = vmatpush1.msra.mxu0 0.0
        %1344 = vmatprep.subr.mxu0 0.0
        %1345 = vmatpush1.msra.mxu0 0.0
        %1346 = vmatprep.subr.mxu0 0.0
        %1347 = vmatpush1.msra.mxu0 0.0
        %1348 = vmatprep.subr.mxu0 0.0
        %1349 = vmatpush1.msra.mxu0 0.0
        %1350 = vmatprep.subr.mxu0 0.0
        %1351 = vmatpush1.msra.mxu0 0.0
        %1352 = vmatprep.subr.mxu0 0.0
        %1353 = vmatpush1.msra.mxu0 0.0
        %1354 = vmatprep.subr.mxu0 0.0
        %1355 = vmatpush1.msra.mxu0 0.0
        %1356 = vmatprep.subr.mxu0 0.0
        %1357 = vmatpush1.msra.mxu0 0.0
        %1358 = vmatprep.subr.mxu0 0.0
        %1359 = vmatpush1.msra.mxu0 0.0
        %1360 = vmatprep.subr.mxu0 0.0
        %1361 = vmatpush1.msra.mxu0 0.0
        %1362 = vmatprep.subr.mxu0 0.0
        %1363 = vmatpush1.msra.mxu0 0.0
        %1364 = vmatprep.subr.mxu0 0.0
        %1365 = vmatpush1.msra.mxu0 0.0
        %1366 = vmatprep.subr.mxu0 0.0
        %1367 = vmatpush1.msra.mxu0 0.0
        %1368 = vmatprep.subr.mxu0 0.0
        %1369 = vmatpush1.msra.mxu0 0.0
        %1370 = vmatprep.subr.mxu0 0.0
        %1371 = vmatpush1.msra.mxu0 0.0
        %1372 = vmatprep.subr.mxu0 0.0
        %1373 = vmatpush1.msra.mxu0 0.0
        %1374 = vmatprep.subr.mxu0 0.0
        %1375 = vmatpush1.msra.mxu0 0.0
        %1376 = vmatprep.subr.mxu0 0.0
        %1377 = vmatpush1.msra.mxu0 0.0
        %1378 = vmatprep.subr.mxu0 0.0
        %1379 = vmatpush1.msra.mxu0 0.0
        %1380 = vmatprep.subr.mxu0 0.0
        %1381 = vmatpush1.msra.mxu0 0.0
        %1382 = vmatprep.mubr.f32.mxu0 0.0
        %1383 = vmatmul.mubr.f32.gmra.mrb[0].mxu0 %v1313
        %v1384 = vpop.f32.mrb[0].mxu0
        %v1385 = vadd.f32 0.0, %v1384
        %v1386 = vpop.f32.mrb[0].mxu0
        %1387 = vmatprep.mubr.f32.mxu0 0.0
        %1388 = vmatmul.mubr.f32.gmra.mrb[0].mxu0 %v1316
        %v1389 = vpop.f32.mrb[0].mxu0
        %v1390 = vadd.f32 0.0, %v1389
        %v1391 = vpop.f32.mrb[0].mxu0
        %1392 = vdwg.mxu0
        %v1393 = vadd.f32 %v1303, %v1385
        %v1394 = vadd.f32 %v1304, %v1390
        %v1395 = vld [vmem:[#allocation3 + $0xa] sm:$0xff]
        %v1396 = vld [vmem:[#allocation3 + $0x22] sm:$0xff]
        %s1397 = scalar_lea.vmem %s389, 128 [#allocation7]
        %v1398 = vld [vmem:[%s1397] sm:$0xff]
        %v1399 = vld [vmem:[%s1397 + $0x8] sm:$0xff]
        %v1400 = vld [vmem:[%s1397 + $0x10] sm:$0xff]
        %v1401 = vld [vmem:[%s1397 + $0x18] sm:$0xff]
        %v1403 = vsel %vm570, %v1395, 0
        %v1406 = vsel %vm570, %v1396, 0
        %1408 = vmatprep.subr.mxu0 0.0
        %1409 = vmatpush1.msra.mxu0 %v1398
        %1410 = vmatprep.subr.mxu0 0.0
        %1411 = vmatpush1.msra.mxu0 %v1399
        %1412 = vmatprep.subr.mxu0 0.0
        %1413 = vmatpush1.msra.mxu0 %v1400
        %1414 = vmatprep.subr.mxu0 0.0
        %1415 = vmatpush1.msra.mxu0 %v1401
        %1416 = vmatprep.subr.mxu0 0.0
        %1417 = vmatpush1.msra.mxu0 0.0
        %1418 = vmatprep.subr.mxu0 0.0
        %1419 = vmatpush1.msra.mxu0 0.0
        %1420 = vmatprep.subr.mxu0 0.0
        %1421 = vmatpush1.msra.mxu0 0.0
        %1422 = vmatprep.subr.mxu0 0.0
        %1423 = vmatpush1.msra.mxu0 0.0
        %1424 = vmatprep.subr.mxu0 0.0
        %1425 = vmatpush1.msra.mxu0 0.0
        %1426 = vmatprep.subr.mxu0 0.0
        %1427 = vmatpush1.msra.mxu0 0.0
        %1428 = vmatprep.subr.mxu0 0.0
        %1429 = vmatpush1.msra.mxu0 0.0
        %1430 = vmatprep.subr.mxu0 0.0
        %1431 = vmatpush1.msra.mxu0 0.0
        %1432 = vmatprep.subr.mxu0 0.0
        %1433 = vmatpush1.msra.mxu0 0.0
        %1434 = vmatprep.subr.mxu0 0.0
        %1435 = vmatpush1.msra.mxu0 0.0
        %1436 = vmatprep.subr.mxu0 0.0
        %1437 = vmatpush1.msra.mxu0 0.0
        %1438 = vmatprep.subr.mxu0 0.0
        %1439 = vmatpush1.msra.mxu0 0.0
        %1440 = vmatprep.subr.mxu0 0.0
        %1441 = vmatpush1.msra.mxu0 0.0
        %1442 = vmatprep.subr.mxu0 0.0
        %1443 = vmatpush1.msra.mxu0 0.0
        %1444 = vmatprep.subr.mxu0 0.0
        %1445 = vmatpush1.msra.mxu0 0.0
        %1446 = vmatprep.subr.mxu0 0.0
        %1447 = vmatpush1.msra.mxu0 0.0
        %1448 = vmatprep.subr.mxu0 0.0
        %1449 = vmatpush1.msra.mxu0 0.0
        %1450 = vmatprep.subr.mxu0 0.0
        %1451 = vmatpush1.msra.mxu0 0.0
        %1452 = vmatprep.subr.mxu0 0.0
        %1453 = vmatpush1.msra.mxu0 0.0
        %1454 = vmatprep.subr.mxu0 0.0
        %1455 = vmatpush1.msra.mxu0 0.0
        %1456 = vmatprep.subr.mxu0 0.0
        %1457 = vmatpush1.msra.mxu0 0.0
        %1458 = vmatprep.subr.mxu0 0.0
        %1459 = vmatpush1.msra.mxu0 0.0
        %1460 = vmatprep.subr.mxu0 0.0
        %1461 = vmatpush1.msra.mxu0 0.0
        %1462 = vmatprep.subr.mxu0 0.0
        %1463 = vmatpush1.msra.mxu0 0.0
        %1464 = vmatprep.subr.mxu0 0.0
        %1465 = vmatpush1.msra.mxu0 0.0
        %1466 = vmatprep.subr.mxu0 0.0
        %1467 = vmatpush1.msra.mxu0 0.0
        %1468 = vmatprep.subr.mxu0 0.0
        %1469 = vmatpush1.msra.mxu0 0.0
        %1470 = vmatprep.subr.mxu0 0.0
        %1471 = vmatpush1.msra.mxu0 0.0
        %1472 = vmatprep.mubr.f32.mxu0 0.0
        %1473 = vmatmul.mubr.f32.gmra.mrb[0].mxu0 %v1403
        %v1474 = vpop.f32.mrb[0].mxu0
        %v1475 = vadd.f32 0.0, %v1474
        %v1476 = vpop.f32.mrb[0].mxu0
        %1477 = vmatprep.mubr.f32.mxu0 0.0
        %1478 = vmatmul.mubr.f32.gmra.mrb[0].mxu0 %v1406
        %v1479 = vpop.f32.mrb[0].mxu0
        %v1480 = vadd.f32 0.0, %v1479
        %v1481 = vpop.f32.mrb[0].mxu0
        %1482 = vdwg.mxu0
        %v1483 = vadd.f32 %v1393, %v1475
        %v1484 = vadd.f32 %v1394, %v1480
        %v1485 = vadd.f32 %v566, %v1483
        %v1486 = vadd.f32 %v567, %v1484
        %1487 = vst.msk [vmem:[#allocation2] sm:$0xff] %vm570, %v1485
        %1488 = vst.msk [vmem:[#allocation2 + $0x8] sm:$0xff] %vm570, %v1486
        %p1489 = scmp.eq.s32.totalorder %s33, 4
        // Predicated region
        $region69: #{tpu_custom_call.1} parent=55 // pred_check
          %p1490 = pneg %p1489
        $region70: #{tpu_custom_call.1} parent=55 // pred_check_branch
          %1492 = sbr.rel (%p1490) target = $region72
        $region71: #{tpu_custom_call.1} parent=55 // pred_region
          %v1493 = vld [vmem:[%s7] sm:$0xff]
          %v1494 = vmul.f32 %v1485, %v1493
          %v1495 = vmul.f32 %v1486, %v1493
          %v1496 = vsel %vm570, %v1494, 0.0
          %1497 = vadd.xlane.f32.xlu0 %v1496
          %v1498 = vpop.xlane.xlu0 %1497
          %v1499 = vsel %vm570, %v1495, 0.0
          %1500 = vadd.xlane.f32.xlu0 %v1499
          %v1501 = vpop.xlane.xlu0 %1500
          %v1504 = vlaneseq
          %v1505 = vand.u32 %v1504, 127
          %v1506 = vlaneseq
          %v1507 = vshrl.u32 %v1506, 7
          %v1508 = vsub.s32 %v1505, %v1507
          %v1509 = vrot.slane %v1498, %v1508
          %v1510 = vlaneseq
          %v1511 = vshrl.u32 %v1510, 7
          %v1512 = vsub.s32 %v1505, %v1511
          %v1513 = vrot.slane %v1501, %v1512
          %vm1514 = vcmask 1041409
          %v1515 = vsel %vm1514, %v1513, %v1509
          %vm1517 = vcmask 58368
          %v1518 = vsel %vm1517, %v1515, 0.0
          %1519 = vadd.xlane.f32.xlu0 %v1518
          %v1520 = vpop.xlane.xlu0 %1519
          %v1521 = vld [vmem:[#allocation4] sm:$0x1]
          %v1523 = vlaneseq
          %v1524 = vshrl.u32 %v1523, 7
          %v1525 = vsub.s32 0, %v1524
          %v1526 = vrot.slane %v1521, %v1525
          %v1528 = vadd.f32 %v1520, %v1526
          %vm1529 = vcmask 1024
          %1530 = vst.msk [vmem:[%s454] sm:$0x3] %vm1529, %v1528
        $region72: #{tpu_custom_call.1} parent=55 // pred_fallthru
          _
        %p1531 = scmp.lt.s32.totalorder %s32, 1
        %s1532 = scalar_select %p1531, %s32, 1
        %s1533 = smul.addr %s1532, 2
        %s1534 = scalar_lea.vmem %s9, %s1533
        // Predicated region
        $region73: #{tpu_custom_call.1} parent=55 // pred_check
          %p1535 = pneg %p272
        $region74: #{tpu_custom_call.1} parent=55 // pred_check_branch
          %1537 = sbr.rel (%p1535) target = $region76
        $region75: #{tpu_custom_call.1} parent=55 // pred_region
          _
        $region76: #{tpu_custom_call.1} parent=55 // pred_fallthru
          _
      $region56: #{tpu_custom_call.1} parent=5 // pred_fallthru
        _
      %p1538 = scmp.le.s32.totalorder 2, %s23
      // Predicated region
      $region77: #{tpu_custom_call.1} parent=5 // pred_check
        %p1539 = pneg %p1538
      $region78: #{tpu_custom_call.1} parent=5 // pred_check_branch
        %1541 = sbr.rel (%p1539) target = $region80
      $region79: #{tpu_custom_call.1} parent=5 // pred_region
        %s1542 = ssub.s32 %s23, 2
        // Predicated region
        $region81: #{tpu_custom_call.1} parent=79 // pred_check
          %p1543 = pneg %p278
        $region82: #{tpu_custom_call.1} parent=79 // pred_check_branch
          %1545 = sbr.rel (%p1543) target = $region84
        $region83: #{tpu_custom_call.1} parent=79 // pred_region
          %p1546 = scmp.lt.s32.totalorder %s34, 1
          %s1547 = scalar_select %p1546, %s34, 1
          %s1548 = smul.addr %s1547, 2
          %s1549 = scalar_lea.vmem %s9, %s1548
        $region84: #{tpu_custom_call.1} parent=79 // pred_fallthru
          _
      $region80: #{tpu_custom_call.1} parent=5 // pred_fallthru
        _
    $region6: #{tpu_custom_call.1} parent=1 // loop_footer
      %s27 = sadd.s32 1, %s23
    $region7: #{tpu_custom_call.1} parent=1 // loop_footer_branch
      %22 = sbr.rel target = $region3
    $region8: #{tpu_custom_call.1} parent=1 // loop_exit
      _
    %1550 = vsyncpa [#allocation6], 1
    %s1551 = scalar_lea.sflag [#allocation6], 1
    %1552 = vsyncpa %s1551, 1
    %1553 = vsyncpa [#allocation8], 1
    %s1554 = scalar_lea.sflag [#allocation8], 1
    %1555 = vsyncpa %s1554, 1

</llo_original>
